<compile_context>
chip_gen: v5e
topology: v5e:2x2
jax: 0.10.0
libtpu: 0.0.40
codegen_flags: <defaults>
</compile_context>

<pallas_src>
import math

import jax
import jax.numpy as jnp
from jax import lax
from jax.experimental import pallas as pl
from jax.experimental.pallas import tpu as pltpu

_EPS = 1e-5                      # nn.BatchNorm2d default eps
_INV_SQRT2 = 0.7071067811865476  # 1/sqrt(2) for exact (erf) GELU
_MXU_BF16 = True                 # bf16 matmul operands, f32 accumulate
_DEFAULT_TILE_M = 512            # lane-axis tile (multiple of 128)


def _gelu(x):
    # Exact GELU (PyTorch nn.GELU default, erf formulation), f32.
    return 0.5 * x * (1.0 + lax.erf(x * _INV_SQRT2))


def _mm_operands(a, b):
    if _MXU_BF16:
        return a.astype(jnp.bfloat16), b.astype(jnp.bfloat16)
    return a, b


# --------------------------------------------------------------------------
# Kernels
# --------------------------------------------------------------------------
def _matmul_stats_kernel(x_ref, w_ref, y_ref, sum_ref, ssq_ref):
    """y = W @ X tile; accumulate per-channel sum / sum-of-squares over M."""
    x = x_ref[...]                                   # (K, TILE_M) f32
    w = w_ref[...]                                   # (N, K)      f32, resident
    wm, xm = _mm_operands(w, x)
    y = jnp.dot(wm, xm, preferred_element_type=jnp.float32)   # (N, TILE_M)
    y_ref[...] = y

    s = jnp.sum(y, axis=1, keepdims=True)            # (N, 1)
    ss = jnp.sum(y * y, axis=1, keepdims=True)       # (N, 1)

    @pl.when(pl.program_id(0) == 0)
    def _():
        sum_ref[...] = s
        ssq_ref[...] = ss

    @pl.when(pl.program_id(0) != 0)
    def _():
        sum_ref[...] += s
        ssq_ref[...] += ss


def _make_bn_gelu_matmul_stats_kernel(valid_m, tile_m):
    """Prologue BN+GELU (previous layer) on the resident tile, column mask,
    matmul against the resident weight, and stats accumulation."""

    def kernel(x_ref, cscale_ref, coffset_ref, w_ref, y_ref, sum_ref, ssq_ref):
        x = x_ref[...]                               # (K, TILE_M), un-normalized
        a = _gelu(x * cscale_ref[...] + coffset_ref[...])      # prev-layer BN+GELU
        # Zero the M-padding columns so they do not pollute this layer's stats.
        col = pl.program_id(0) * tile_m + lax.broadcasted_iota(
            jnp.int32, a.shape, 1)
        a = jnp.where(col < valid_m, a, 0.0)

        wm, am = _mm_operands(w_ref[...], a)
        y = jnp.dot(wm, am, preferred_element_type=jnp.float32)  # (N, TILE_M)
        y_ref[...] = y

        s = jnp.sum(y, axis=1, keepdims=True)
        ss = jnp.sum(y * y, axis=1, keepdims=True)

        @pl.when(pl.program_id(0) == 0)
        def _():
            sum_ref[...] = s
            ssq_ref[...] = ss

        @pl.when(pl.program_id(0) != 0)
        def _():
            sum_ref[...] += s
            ssq_ref[...] += ss

    return kernel


def _bn_gelu_kernel(y_ref, scale_ref, offset_ref, a_ref):
    """Final BN + GELU (last layer's output)."""
    y = y_ref[...]
    a_ref[...] = _gelu(y * scale_ref[...] + offset_ref[...])


# --------------------------------------------------------------------------
# pallas_call wrappers
# --------------------------------------------------------------------------
def _conv_matmul_stats(x_col, w_mat, tile_m):
    K, Mp = x_col.shape
    N = w_mat.shape[0]
    grid = (Mp // tile_m,)
    return pl.pallas_call(
        _matmul_stats_kernel,
        out_shape=(jax.ShapeDtypeStruct((N, Mp), jnp.float32),
                   jax.ShapeDtypeStruct((N, 1), jnp.float32),
                   jax.ShapeDtypeStruct((N, 1), jnp.float32)),
        grid=grid,
        in_specs=[pl.BlockSpec((K, tile_m), lambda m: (0, m)),
                  pl.BlockSpec((N, K), lambda m: (0, 0))],
        out_specs=(pl.BlockSpec((N, tile_m), lambda m: (0, m)),
                   pl.BlockSpec((N, 1), lambda m: (0, 0)),
                   pl.BlockSpec((N, 1), lambda m: (0, 0))),
        compiler_params=pltpu.CompilerParams(
            dimension_semantics=("arbitrary",)),     # stats accumulate over M
        cost_estimate=pl.CostEstimate(
            flops=2 * Mp * K * N + 3 * N * Mp,
            transcendentals=0,
            bytes_accessed=4 * (K * Mp + N * K + N * Mp + 4 * N)),
    )(x_col, w_mat)


def _fused_bn_gelu_conv_stats(x_col, cscale, coffset, w_mat, valid_m, tile_m):
    K, Mp = x_col.shape
    N = w_mat.shape[0]
    grid = (Mp // tile_m,)
    kernel = _make_bn_gelu_matmul_stats_kernel(valid_m, tile_m)
    return pl.pallas_call(
        kernel,
        out_shape=(jax.ShapeDtypeStruct((N, Mp), jnp.float32),
                   jax.ShapeDtypeStruct((N, 1), jnp.float32),
                   jax.ShapeDtypeStruct((N, 1), jnp.float32)),
        grid=grid,
        in_specs=[pl.BlockSpec((K, tile_m), lambda m: (0, m)),
                  pl.BlockSpec((K, 1), lambda m: (0, 0)),
                  pl.BlockSpec((K, 1), lambda m: (0, 0)),
                  pl.BlockSpec((N, K), lambda m: (0, 0))],
        out_specs=(pl.BlockSpec((N, tile_m), lambda m: (0, m)),
                   pl.BlockSpec((N, 1), lambda m: (0, 0)),
                   pl.BlockSpec((N, 1), lambda m: (0, 0))),
        compiler_params=pltpu.CompilerParams(
            dimension_semantics=("arbitrary",)),
        cost_estimate=pl.CostEstimate(
            flops=2 * Mp * K * N + 8 * K * Mp + 3 * N * Mp,
            transcendentals=K * Mp,
            bytes_accessed=4 * (K * Mp + 2 * K + N * K + N * Mp + 4 * N)),
    )(x_col, cscale, coffset, w_mat)


def _bn_gelu(y, scale, offset, tile_m):
    N, Mp = y.shape
    grid = (Mp // tile_m,)
    return pl.pallas_call(
        _bn_gelu_kernel,
        out_shape=jax.ShapeDtypeStruct((N, Mp), jnp.float32),
        grid=grid,
        in_specs=[pl.BlockSpec((N, tile_m), lambda m: (0, m)),
                  pl.BlockSpec((N, 1), lambda m: (0, 0)),
                  pl.BlockSpec((N, 1), lambda m: (0, 0))],
        out_specs=pl.BlockSpec((N, tile_m), lambda m: (0, m)),
        compiler_params=pltpu.CompilerParams(
            dimension_semantics=("parallel",)),
        cost_estimate=pl.CostEstimate(
            flops=8 * N * Mp,
            transcendentals=N * Mp,
            bytes_accessed=4 * (2 * N * Mp + 2 * N)),
    )(y, scale, offset)


# --------------------------------------------------------------------------
# JAX-side glue (layout plumbing only; all heavy math is in the kernels)
# --------------------------------------------------------------------------
def _round_up(x, m):
    return ((x + m - 1) // m) * m


def _pad_cols(x2d, mp):
    m = x2d.shape[1]
    return x2d if mp == m else jnp.pad(x2d, ((0, 0), (0, mp - m)))


def _im2col_t(xc, kh, kw, stride, pad, pad_value=None):
    """xc: (C, B, H, W) -> (kh*kw*C, B*Ho*Wo); column index = (i*kw+j)*C + c.

    If pad_value (shape (C,)) is given, spatial padding uses that per-channel
    value (the batch mean) so the fused in-kernel BN+GELU maps the border to
    exactly 0, i.e. the zero-padding of the *post*-BN/GELU activation.
    """
    C, B, H, W = xc.shape
    if pad > 0:
        if pad_value is None:
            xp = jnp.pad(xc, ((0, 0), (0, 0), (pad, pad), (pad, pad)))
        else:
            pv = pad_value.reshape(C, 1, 1, 1)
            xp = jnp.pad(xc - pv, ((0, 0), (0, 0), (pad, pad), (pad, pad))) + pv
    else:
        xp = xc
    Ho = (H + 2 * pad - kh) // stride + 1
    Wo = (W + 2 * pad - kw) // stride + 1
    taps = []
    for i in range(kh):
        for j in range(kw):
            taps.append(xp[:, :, i:i + stride * Ho:stride,
                           j:j + stride * Wo:stride])
    cols = jnp.stack(taps, axis=0)                    # (kh*kw, C, B, Ho, Wo)
    return cols.reshape(kh * kw * C, B * Ho * Wo), (B, Ho, Wo)


def _w_matrix(w):
    """PyTorch (Cout, Cin, kh, kw) -> (Cout, kh*kw*Cin) matching im2col order."""
    cout, cin, kh, kw = w.shape
    return jnp.transpose(w, (0, 2, 3, 1)).reshape(cout, kh * kw * cin)


def _bn_affine(s, ss, m_true):
    """Per-channel (sum, sumsq) -> BN scale/offset (gamma=1, beta=0)."""
    mean = s[:, 0] / m_true
    var = jnp.maximum(ss[:, 0] / m_true - mean * mean, 0.0)  # biased variance
    scale = lax.rsqrt(var + _EPS)
    offset = -mean * scale
    return scale[:, None], offset[:, None], mean


def _pick_tile(m, tile_m):
    t = min(tile_m, _round_up(m, 128))
    return t, _round_up(m, t)


def stem_forward(x_nchw, weights, tile_m=_DEFAULT_TILE_M):
    """weights: 4 conv weights in PyTorch layout (Cout, Cin, kh, kw)."""
    w1, w2, w3, w4 = weights
    xc = jnp.transpose(x_nchw, (1, 0, 2, 3))          # (Cin, B, H, W)

    # ---- conv1: 3x3 s2 p1 on the raw (zero-padded) input -----------------
    x1, (B1, H1, W1) = _im2col_t(xc, 3, 3, 2, 1)
    m1 = x1.shape[1]
    t1, mp1 = _pick_tile(m1, tile_m)
    y1, s1, ss1 = _conv_matmul_stats(_pad_cols(x1, mp1), _w_matrix(w1), t1)
    scale1, offset1, mean1 = _bn_affine(s1, ss1, m1)
    c1 = y1.shape[0]

    # ---- conv2: BN1+GELU fused into the kernel prologue -------------------
    y1_sp = y1[:, :m1].reshape(c1, B1, H1, W1)
    x2, (B2, H2, W2) = _im2col_t(y1_sp, 3, 3, 2, 1, pad_value=mean1)
    m2 = x2.shape[1]
    t2, mp2 = _pick_tile(m2, tile_m)
    cs2 = jnp.tile(scale1[:, 0], 9)[:, None]          # per-K-slot scale, K=9*c1
    co2 = jnp.tile(offset1[:, 0], 9)[:, None]
    y2, s2, ss2 = _fused_bn_gelu_conv_stats(
        _pad_cols(x2, mp2), cs2, co2, _w_matrix(w2), m2, t2)
    scale2, offset2, mean2 = _bn_affine(s2, ss2, m2)
    c2 = y2.shape[0]

    # ---- conv3: BN2+GELU fused into the kernel prologue -------------------
    y2_sp = y2[:, :m2].reshape(c2, B2, H2, W2)
    x3, (B3, H3, W3) = _im2col_t(y2_sp, 3, 3, 2, 1, pad_value=mean2)
    m3 = x3.shape[1]
    t3, mp3 = _pick_tile(m3, tile_m)
    cs3 = jnp.tile(scale2[:, 0], 9)[:, None]
    co3 = jnp.tile(offset2[:, 0], 9)[:, None]
    y3, s3, ss3 = _fused_bn_gelu_conv_stats(
        _pad_cols(x3, mp3), cs3, co3, _w_matrix(w3), m3, t3)
    scale3, offset3, _ = _bn_affine(s3, ss3, m3)

    # ---- conv4: 1x1 fused directly on y3 (no im2col; weight stays in VMEM) -
    y4, s4, ss4 = _fused_bn_gelu_conv_stats(
        y3, scale3, offset3, _w_matrix(w4), m3, t3)
    scale4, offset4, _ = _bn_affine(s4, ss4, m3)

    # ---- final BN4 + GELU --------------------------------------------------
    a4 = _bn_gelu(y4, scale4, offset4, t3)
    c4 = a4.shape[0]
    out = a4[:, :m3].reshape(c4, B3, H3, W3)
    return jnp.transpose(out, (1, 0, 2, 3))           # -> NCHW


def _kaiming_normal(key, cout, cin, kh, kw):
    # nn.init.kaiming_normal_ default: fan_in mode, leaky_relu(a=0) -> sqrt(2/fan_in)
    fan_in = cin * kh * kw
    std = math.sqrt(2.0 / fan_in)
    return std * jax.random.normal(key, (cout, cin, kh, kw), dtype=jnp.float32)


if __name__ == "__main__":
    key = jax.random.PRNGKey(0)
    kx, k1, k2, k3, k4 = jax.random.split(key, 5)

    B, in_channels, H, W = 2, 1, 16, 16
    out_channels = 4
    c1 = out_channels
    c2 = 2 * c1
    c3 = 2 * c2
    c4 = 2 * c3

    x = jax.random.normal(kx, (B, in_channels, H, W), dtype=jnp.float32)
    weights = [
        _kaiming_normal(k1, c1, in_channels, 3, 3),
        _kaiming_normal(k2, c2, c1, 3, 3),
        _kaiming_normal(k3, c3, c2, 3, 3),
        _kaiming_normal(k4, c4, c3, 1, 1),
    ]

    stem_jit = jax.jit(lambda xx, ws: stem_forward(xx, ws))
    out = jax.block_until_ready(stem_jit(x, weights))
    assert out.shape == (B, c4, H // 8, W // 8), out.shape
    assert out.dtype == jnp.float32
    assert bool(jnp.all(jnp.isfinite(out)))
    print("KERNEL_OK")
</pallas_src>

<mosaic_0001>
module attributes {stable_mosaic.version = 11 : i64} {
  func.func @_matmul_stats_kernel(%arg0: i32, %arg1: memref<9x128xf32, #tpu.memory_space<vmem>>, %arg2: memref<4x9xf32, #tpu.memory_space<vmem>>, %arg3: memref<4x128xf32, #tpu.memory_space<vmem>>, %arg4: memref<4x1xf32, #tpu.memory_space<vmem>>, %arg5: memref<4x1xf32, #tpu.memory_space<vmem>>) attributes {dimension_semantics = [#tpu.dimension_semantics<arbitrary>], iteration_bounds = array<i64: 1>, scalar_prefetch = 0 : i64, scratch_operands = 0 : i64, tpu.core_type = #tpu.core_type<tc>, window_params = [{transform_indices = @transform_0, window_bounds = array<i64: 9, 128>}, {pipeline_mode = #tpu.pipeline_mode<synchronous>, transform_indices = @transform_1, window_bounds = array<i64: 4, 9>}, {transform_indices = @transform_2, window_bounds = array<i64: 4, 128>}, {pipeline_mode = #tpu.pipeline_mode<synchronous>, transform_indices = @transform_3, window_bounds = array<i64: 4, 1>}, {pipeline_mode = #tpu.pipeline_mode<synchronous>, transform_indices = @transform_4, window_bounds = array<i64: 4, 1>}]} {
    %c0 = arith.constant 0 : index
    %c0_0 = arith.constant 0 : index
    %0 = vector.load %arg1[%c0, %c0_0] : memref<9x128xf32, #tpu.memory_space<vmem>>, vector<9x128xf32>
    %c0_1 = arith.constant 0 : index
    %c0_2 = arith.constant 0 : index
    %1 = vector.load %arg2[%c0_1, %c0_2] : memref<4x9xf32, #tpu.memory_space<vmem>>, vector<4x9xf32>
    %2 = arith.truncf %1 : vector<4x9xf32> to vector<4x9xbf16>
    %3 = arith.truncf %0 : vector<9x128xf32> to vector<9x128xbf16>
    %cst = arith.constant dense<0.000000e+00> : vector<4x128xf32>
    %4 = tpu.matmul %2, %3, %cst {dimension_numbers = #tpu.dot_dimension_numbers<[1], [0], [0], [1], [0, 0, 1, 1], [], []>} : vector<4x9xbf16>, vector<9x128xbf16>, vector<4x128xf32> -> vector<4x128xf32>
    %c0_3 = arith.constant 0 : index
    %c0_4 = arith.constant 0 : index
    %5 = vector.load %arg3[%c0_3, %c0_4] : memref<4x128xf32, #tpu.memory_space<vmem>>, vector<4x128xf32>
    tpu.vector_store %arg3[%c0_3, %c0_4], %4 {strides = array<i32>} : memref<4x128xf32, #tpu.memory_space<vmem>>, vector<4x128xf32>,
    %cst_5 = arith.constant dense<0.000000e+00> : vector<4xf32>
    %6 = vector.multi_reduction <add>, %4, %cst_5 [1] : vector<4x128xf32> to vector<4xf32>
    %7 = vector.shape_cast %6 : vector<4xf32> to vector<4x1xf32>
    %8 = arith.mulf %4, %4 : vector<4x128xf32>
    %cst_6 = arith.constant dense<0.000000e+00> : vector<4xf32>
    %9 = vector.multi_reduction <add>, %8, %cst_6 [1] : vector<4x128xf32> to vector<4xf32>
    %10 = vector.shape_cast %9 : vector<4xf32> to vector<4x1xf32>
    %c0_i32 = arith.constant 0 : i32
    %11 = arith.cmpi eq, %arg0, %c0_i32 : i32
    %12 = arith.extui %11 : i1 to i32
    %c0_i32_7 = arith.constant 0 : i32
    %13 = arith.cmpi ne, %12, %c0_i32_7 : i32
    scf.if %13 {
      %c0_10 = arith.constant 0 : index
      %c0_11 = arith.constant 0 : index
      %17 = vector.load %arg4[%c0_10, %c0_11] : memref<4x1xf32, #tpu.memory_space<vmem>>, vector<4x1xf32>
      tpu.vector_store %arg4[%c0_10, %c0_11], %7 {strides = array<i32>} : memref<4x1xf32, #tpu.memory_space<vmem>>, vector<4x1xf32>,
      %c0_12 = arith.constant 0 : index
      %c0_13 = arith.constant 0 : index
      %18 = vector.load %arg5[%c0_12, %c0_13] : memref<4x1xf32, #tpu.memory_space<vmem>>, vector<4x1xf32>
      tpu.vector_store %arg5[%c0_12, %c0_13], %10 {strides = array<i32>} : memref<4x1xf32, #tpu.memory_space<vmem>>, vector<4x1xf32>,
    } else {
    }
    %c0_i32_8 = arith.constant 0 : i32
    %14 = arith.cmpi ne, %arg0, %c0_i32_8 : i32
    %15 = arith.extui %14 : i1 to i32
    %c0_i32_9 = arith.constant 0 : i32
    %16 = arith.cmpi ne, %15, %c0_i32_9 : i32
    scf.if %16 {
      %c0_10 = arith.constant 0 : index
      %c0_11 = arith.constant 0 : index
      %17 = vector.load %arg4[%c0_10, %c0_11] : memref<4x1xf32, #tpu.memory_space<vmem>>, vector<4x1xf32>
      %18 = arith.addf %17, %7 : vector<4x1xf32>
      %c0_12 = arith.constant 0 : index
      %c0_13 = arith.constant 0 : index
      %19 = vector.load %arg4[%c0_12, %c0_13] : memref<4x1xf32, #tpu.memory_space<vmem>>, vector<4x1xf32>
      tpu.vector_store %arg4[%c0_12, %c0_13], %18 {strides = array<i32>} : memref<4x1xf32, #tpu.memory_space<vmem>>, vector<4x1xf32>,
      %c0_14 = arith.constant 0 : index
      %c0_15 = arith.constant 0 : index
      %20 = vector.load %arg5[%c0_14, %c0_15] : memref<4x1xf32, #tpu.memory_space<vmem>>, vector<4x1xf32>
      %21 = arith.addf %20, %10 : vector<4x1xf32>
      %c0_16 = arith.constant 0 : index
      %c0_17 = arith.constant 0 : index
      %22 = vector.load %arg5[%c0_16, %c0_17] : memref<4x1xf32, #tpu.memory_space<vmem>>, vector<4x1xf32>
      tpu.vector_store %arg5[%c0_16, %c0_17], %21 {strides = array<i32>} : memref<4x1xf32, #tpu.memory_space<vmem>>, vector<4x1xf32>,
    } else {
    }
    return
  }
  func.func @transform_0(%arg0: i32) -> (i32, i32) {
    %c0_i32 = arith.constant 0 : i32
    %c0_i32_0 = arith.constant 0 : i32
    return %c0_i32, %arg0 : i32, i32
  }
  func.func @transform_1(%arg0: i32) -> (i32, i32) {
    %c0_i32 = arith.constant 0 : i32
    %c0_i32_0 = arith.constant 0 : i32
    %c0_i32_1 = arith.constant 0 : i32
    return %c0_i32, %c0_i32_0 : i32, i32
  }
  func.func @transform_2(%arg0: i32) -> (i32, i32) {
    %c0_i32 = arith.constant 0 : i32
    %c0_i32_0 = arith.constant 0 : i32
    return %c0_i32, %arg0 : i32, i32
  }
  func.func @transform_3(%arg0: i32) -> (i32, i32) {
    %c0_i32 = arith.constant 0 : i32
    %c0_i32_0 = arith.constant 0 : i32
    %c0_i32_1 = arith.constant 0 : i32
    return %c0_i32, %c0_i32_0 : i32, i32
  }
  func.func @transform_4(%arg0: i32) -> (i32, i32) {
    %c0_i32 = arith.constant 0 : i32
    %c0_i32_0 = arith.constant 0 : i32
    %c0_i32_1 = arith.constant 0 : i32
    return %c0_i32, %c0_i32_0 : i32, i32
  }
}

module attributes {stable_mosaic.version = 11 : i64} {
  func.func @kernel(%arg0: i32, %arg1: memref<36x128xf32, #tpu.memory_space<vmem>>, %arg2: memref<36x1xf32, #tpu.memory_space<vmem>>, %arg3: memref<36x1xf32, #tpu.memory_space<vmem>>, %arg4: memref<8x36xf32, #tpu.memory_space<vmem>>, %arg5: memref<8x128xf32, #tpu.memory_space<vmem>>, %arg6: memref<8x1xf32, #tpu.memory_space<vmem>>, %arg7: memref<8x1xf32, #tpu.memory_space<vmem>>) attributes {dimension_semantics = [#tpu.dimension_semantics<arbitrary>], iteration_bounds = array<i64: 1>, scalar_prefetch = 0 : i64, scratch_operands = 0 : i64, tpu.core_type = #tpu.core_type<tc>, window_params = [{transform_indices = @transform_0, window_bounds = array<i64: 36, 128>}, {pipeline_mode = #tpu.pipeline_mode<synchronous>, transform_indices = @transform_1, window_bounds = array<i64: 36, 1>}, {pipeline_mode = #tpu.pipeline_mode<synchronous>, transform_indices = @transform_2, window_bounds = array<i64: 36, 1>}, {pipeline_mode = #tpu.pipeline_mode<synchronous>, transform_indices = @transform_3, window_bounds = array<i64: 8, 36>}, {transform_indices = @transform_4, window_bounds = array<i64: 8, 128>}, {pipeline_mode = #tpu.pipeline_mode<synchronous>, transform_indices = @transform_5, window_bounds = array<i64: 8, 1>}, {pipeline_mode = #tpu.pipeline_mode<synchronous>, transform_indices = @transform_6, window_bounds = array<i64: 8, 1>}]} {
    %c0 = arith.constant 0 : index
    %c0_0 = arith.constant 0 : index
    %0 = vector.load %arg1[%c0, %c0_0] : memref<36x128xf32, #tpu.memory_space<vmem>>, vector<36x128xf32>
    %c0_1 = arith.constant 0 : index
    %c0_2 = arith.constant 0 : index
    %1 = vector.load %arg2[%c0_1, %c0_2] : memref<36x1xf32, #tpu.memory_space<vmem>>, vector<36x1xf32>
    %2 = vector.broadcast %1 : vector<36x1xf32> to vector<36x128xf32>
    %3 = arith.mulf %0, %2 : vector<36x128xf32>
    %c0_3 = arith.constant 0 : index
    %c0_4 = arith.constant 0 : index
    %4 = vector.load %arg3[%c0_3, %c0_4] : memref<36x1xf32, #tpu.memory_space<vmem>>, vector<36x1xf32>
    %5 = vector.broadcast %4 : vector<36x1xf32> to vector<36x128xf32>
    %6 = arith.addf %3, %5 : vector<36x128xf32>
    %cst = arith.constant 5.000000e-01 : f32
    %7 = vector.broadcast %cst : f32 to vector<36x128xf32>
    %8 = arith.mulf %7, %6 : vector<36x128xf32>
    %cst_5 = arith.constant 0.707106769 : f32
    %9 = vector.broadcast %cst_5 : f32 to vector<36x128xf32>
    %10 = arith.mulf %6, %9 : vector<36x128xf32>
    %11 = math.erf %10 : vector<36x128xf32>
    %cst_6 = arith.constant 1.000000e+00 : f32
    %12 = vector.broadcast %cst_6 : f32 to vector<36x128xf32>
    %13 = arith.addf %12, %11 : vector<36x128xf32>
    %14 = arith.mulf %8, %13 : vector<36x128xf32>
    %c128_i32 = arith.constant 128 : i32
    %15 = arith.muli %arg0, %c128_i32 : i32
    %16 = tpu.iota {dimensions = array<i32: 1>} : vector<36x128xi32>
    %17 = vector.broadcast %15 : i32 to vector<36x128xi32>
    %18 = arith.addi %17, %16 : vector<36x128xi32>
    %c32_i32 = arith.constant 32 : i32
    %19 = vector.broadcast %c32_i32 : i32 to vector<36x128xi32>
    %20 = arith.cmpi slt, %18, %19 : vector<36x128xi32>
    %cst_7 = arith.constant 0.000000e+00 : f32
    %21 = vector.broadcast %cst_7 : f32 to vector<36x128xf32>
    %22 = arith.select %20, %14, %21 : vector<36x128xi1>, vector<36x128xf32>
    %c0_8 = arith.constant 0 : index
    %c0_9 = arith.constant 0 : index
    %23 = vector.load %arg4[%c0_8, %c0_9] : memref<8x36xf32, #tpu.memory_space<vmem>>, vector<8x36xf32>
    %24 = arith.truncf %23 : vector<8x36xf32> to vector<8x36xbf16>
    %25 = arith.truncf %22 : vector<36x128xf32> to vector<36x128xbf16>
    %cst_10 = arith.constant dense<0.000000e+00> : vector<8x128xf32>
    %26 = tpu.matmul %24, %25, %cst_10 {dimension_numbers = #tpu.dot_dimension_numbers<[1], [0], [0], [1], [0, 0, 1, 1], [], []>} : vector<8x36xbf16>, vector<36x128xbf16>, vector<8x128xf32> -> vector<8x128xf32>
    %c0_11 = arith.constant 0 : index
    %c0_12 = arith.constant 0 : index
    %27 = vector.load %arg5[%c0_11, %c0_12] : memref<8x128xf32, #tpu.memory_space<vmem>>, vector<8x128xf32>
    tpu.vector_store %arg5[%c0_11, %c0_12], %26 {strides = array<i32>} : memref<8x128xf32, #tpu.memory_space<vmem>>, vector<8x128xf32>,
    %cst_13 = arith.constant dense<0.000000e+00> : vector<8xf32>
    %28 = vector.multi_reduction <add>, %26, %cst_13 [1] : vector<8x128xf32> to vector<8xf32>
    %29 = vector.shape_cast %28 : vector<8xf32> to vector<8x1xf32>
    %30 = arith.mulf %26, %26 : vector<8x128xf32>
    %cst_14 = arith.constant dense<0.000000e+00> : vector<8xf32>
    %31 = vector.multi_reduction <add>, %30, %cst_14 [1] : vector<8x128xf32> to vector<8xf32>
    %32 = vector.shape_cast %31 : vector<8xf32> to vector<8x1xf32>
    %c0_i32 = arith.constant 0 : i32
    %33 = arith.cmpi eq, %arg0, %c0_i32 : i32
    %34 = arith.extui %33 : i1 to i32
    %c0_i32_15 = arith.constant 0 : i32
    %35 = arith.cmpi ne, %34, %c0_i32_15 : i32
    scf.if %35 {
      %c0_18 = arith.constant 0 : index
      %c0_19 = arith.constant 0 : index
      %39 = vector.load %arg6[%c0_18, %c0_19] : memref<8x1xf32, #tpu.memory_space<vmem>>, vector<8x1xf32>
      tpu.vector_store %arg6[%c0_18, %c0_19], %29 {strides = array<i32>} : memref<8x1xf32, #tpu.memory_space<vmem>>, vector<8x1xf32>,
      %c0_20 = arith.constant 0 : index
      %c0_21 = arith.constant 0 : index
      %40 = vector.load %arg7[%c0_20, %c0_21] : memref<8x1xf32, #tpu.memory_space<vmem>>, vector<8x1xf32>
      tpu.vector_store %arg7[%c0_20, %c0_21], %32 {strides = array<i32>} : memref<8x1xf32, #tpu.memory_space<vmem>>, vector<8x1xf32>,
    } else {
    }
    %c0_i32_16 = arith.constant 0 : i32
    %36 = arith.cmpi ne, %arg0, %c0_i32_16 : i32
    %37 = arith.extui %36 : i1 to i32
    %c0_i32_17 = arith.constant 0 : i32
    %38 = arith.cmpi ne, %37, %c0_i32_17 : i32
    scf.if %38 {
      %c0_18 = arith.constant 0 : index
      %c0_19 = arith.constant 0 : index
      %39 = vector.load %arg6[%c0_18, %c0_19] : memref<8x1xf32, #tpu.memory_space<vmem>>, vector<8x1xf32>
      %40 = arith.addf %39, %29 : vector<8x1xf32>
      %c0_20 = arith.constant 0 : index
      %c0_21 = arith.constant 0 : index
      %41 = vector.load %arg6[%c0_20, %c0_21] : memref<8x1xf32, #tpu.memory_space<vmem>>, vector<8x1xf32>
      tpu.vector_store %arg6[%c0_20, %c0_21], %40 {strides = array<i32>} : memref<8x1xf32, #tpu.memory_space<vmem>>, vector<8x1xf32>,
      %c0_22 = arith.constant 0 : index
      %c0_23 = arith.constant 0 : index
      %42 = vector.load %arg7[%c0_22, %c0_23] : memref<8x1xf32, #tpu.memory_space<vmem>>, vector<8x1xf32>
      %43 = arith.addf %42, %32 : vector<8x1xf32>
      %c0_24 = arith.constant 0 : index
      %c0_25 = arith.constant 0 : index
      %44 = vector.load %arg7[%c0_24, %c0_25] : memref<8x1xf32, #tpu.memory_space<vmem>>, vector<8x1xf32>
      tpu.vector_store %arg7[%c0_24, %c0_25], %43 {strides = array<i32>} : memref<8x1xf32, #tpu.memory_space<vmem>>, vector<8x1xf32>,
    } else {
    }
    return
  }
  func.func @transform_0(%arg0: i32) -> (i32, i32) {
    %c0_i32 = arith.constant 0 : i32
    %c0_i32_0 = arith.constant 0 : i32
    return %c0_i32, %arg0 : i32, i32
  }
  func.func @transform_1(%arg0: i32) -> (i32, i32) {
    %c0_i32 = arith.constant 0 : i32
    %c0_i32_0 = arith.constant 0 : i32
    %c0_i32_1 = arith.constant 0 : i32
    return %c0_i32, %c0_i32_0 : i32, i32
  }
  func.func @transform_2(%arg0: i32) -> (i32, i32) {
    %c0_i32 = arith.constant 0 : i32
    %c0_i32_0 = arith.constant 0 : i32
    %c0_i32_1 = arith.constant 0 : i32
    return %c0_i32, %c0_i32_0 : i32, i32
  }
  func.func @transform_3(%arg0: i32) -> (i32, i32) {
    %c0_i32 = arith.constant 0 : i32
    %c0_i32_0 = arith.constant 0 : i32
    %c0_i32_1 = arith.constant 0 : i32
    return %c0_i32, %c0_i32_0 : i32, i32
  }
  func.func @transform_4(%arg0: i32) -> (i32, i32) {
    %c0_i32 = arith.constant 0 : i32
    %c0_i32_0 = arith.constant 0 : i32
    return %c0_i32, %arg0 : i32, i32
  }
  func.func @transform_5(%arg0: i32) -> (i32, i32) {
    %c0_i32 = arith.constant 0 : i32
    %c0_i32_0 = arith.constant 0 : i32
    %c0_i32_1 = arith.constant 0 : i32
    return %c0_i32, %c0_i32_0 : i32, i32
  }
  func.func @transform_6(%arg0: i32) -> (i32, i32) {
    %c0_i32 = arith.constant 0 : i32
    %c0_i32_0 = arith.constant 0 : i32
    %c0_i32_1 = arith.constant 0 : i32
    return %c0_i32, %c0_i32_0 : i32, i32
  }
}

module attributes {stable_mosaic.version = 11 : i64} {
  func.func @_bn_gelu_kernel(%arg0: i32, %arg1: memref<32x128xf32, #tpu.memory_space<vmem>>, %arg2: memref<32x1xf32, #tpu.memory_space<vmem>>, %arg3: memref<32x1xf32, #tpu.memory_space<vmem>>, %arg4: memref<32x128xf32, #tpu.memory_space<vmem>>) attributes {dimension_semantics = [#tpu.dimension_semantics<parallel>], iteration_bounds = array<i64: 1>, scalar_prefetch = 0 : i64, scratch_operands = 0 : i64, tpu.core_type = #tpu.core_type<tc>, window_params = [{transform_indices = @transform_0, window_bounds = array<i64: 32, 128>}, {pipeline_mode = #tpu.pipeline_mode<synchronous>, transform_indices = @transform_1, window_bounds = array<i64: 32, 1>}, {pipeline_mode = #tpu.pipeline_mode<synchronous>, transform_indices = @transform_2, window_bounds = array<i64: 32, 1>}, {transform_indices = @transform_3, window_bounds = array<i64: 32, 128>}]} {
    %c0 = arith.constant 0 : index
    %c0_0 = arith.constant 0 : index
    %0 = vector.load %arg1[%c0, %c0_0] : memref<32x128xf32, #tpu.memory_space<vmem>>, vector<32x128xf32>
    %c0_1 = arith.constant 0 : index
    %c0_2 = arith.constant 0 : index
    %1 = vector.load %arg2[%c0_1, %c0_2] : memref<32x1xf32, #tpu.memory_space<vmem>>, vector<32x1xf32>
    %2 = vector.broadcast %1 : vector<32x1xf32> to vector<32x128xf32>
    %3 = arith.mulf %0, %2 : vector<32x128xf32>
    %c0_3 = arith.constant 0 : index
    %c0_4 = arith.constant 0 : index
    %4 = vector.load %arg3[%c0_3, %c0_4] : memref<32x1xf32, #tpu.memory_space<vmem>>, vector<32x1xf32>
    %5 = vector.broadcast %4 : vector<32x1xf32> to vector<32x128xf32>
    %6 = arith.addf %3, %5 : vector<32x128xf32>
    %cst = arith.constant 5.000000e-01 : f32
    %7 = vector.broadcast %cst : f32 to vector<32x128xf32>
    %8 = arith.mulf %7, %6 : vector<32x128xf32>
    %cst_5 = arith.constant 0.707106769 : f32
    %9 = vector.broadcast %cst_5 : f32 to vector<32x128xf32>
    %10 = arith.mulf %6, %9 : vector<32x128xf32>
    %11 = math.erf %10 : vector<32x128xf32>
    %cst_6 = arith.constant 1.000000e+00 : f32
    %12 = vector.broadcast %cst_6 : f32 to vector<32x128xf32>
    %13 = arith.addf %12, %11 : vector<32x128xf32>
    %14 = arith.mulf %8, %13 : vector<32x128xf32>
    %c0_7 = arith.constant 0 : index
    %c0_8 = arith.constant 0 : index
    %15 = vector.load %arg4[%c0_7, %c0_8] : memref<32x128xf32, #tpu.memory_space<vmem>>, vector<32x128xf32>
    tpu.vector_store %arg4[%c0_7, %c0_8], %14 {strides = array<i32>} : memref<32x128xf32, #tpu.memory_space<vmem>>, vector<32x128xf32>,
    return
  }
  func.func @transform_0(%arg0: i32) -> (i32, i32) {
    %c0_i32 = arith.constant 0 : i32
    %c0_i32_0 = arith.constant 0 : i32
    return %c0_i32, %arg0 : i32, i32
  }
  func.func @transform_1(%arg0: i32) -> (i32, i32) {
    %c0_i32 = arith.constant 0 : i32
    %c0_i32_0 = arith.constant 0 : i32
    %c0_i32_1 = arith.constant 0 : i32
    return %c0_i32, %c0_i32_0 : i32, i32
  }
  func.func @transform_2(%arg0: i32) -> (i32, i32) {
    %c0_i32 = arith.constant 0 : i32
    %c0_i32_0 = arith.constant 0 : i32
    %c0_i32_1 = arith.constant 0 : i32
    return %c0_i32, %c0_i32_0 : i32, i32
  }
  func.func @transform_3(%arg0: i32) -> (i32, i32) {
    %c0_i32 = arith.constant 0 : i32
    %c0_i32_0 = arith.constant 0 : i32
    return %c0_i32, %arg0 : i32, i32
  }
}

module attributes {stable_mosaic.version = 11 : i64} {
  func.func @kernel(%arg0: i32, %arg1: memref<72x128xf32, #tpu.memory_space<vmem>>, %arg2: memref<72x1xf32, #tpu.memory_space<vmem>>, %arg3: memref<72x1xf32, #tpu.memory_space<vmem>>, %arg4: memref<16x72xf32, #tpu.memory_space<vmem>>, %arg5: memref<16x128xf32, #tpu.memory_space<vmem>>, %arg6: memref<16x1xf32, #tpu.memory_space<vmem>>, %arg7: memref<16x1xf32, #tpu.memory_space<vmem>>) attributes {dimension_semantics = [#tpu.dimension_semantics<arbitrary>], iteration_bounds = array<i64: 1>, scalar_prefetch = 0 : i64, scratch_operands = 0 : i64, tpu.core_type = #tpu.core_type<tc>, window_params = [{transform_indices = @transform_0, window_bounds = array<i64: 72, 128>}, {pipeline_mode = #tpu.pipeline_mode<synchronous>, transform_indices = @transform_1, window_bounds = array<i64: 72, 1>}, {pipeline_mode = #tpu.pipeline_mode<synchronous>, transform_indices = @transform_2, window_bounds = array<i64: 72, 1>}, {pipeline_mode = #tpu.pipeline_mode<synchronous>, transform_indices = @transform_3, window_bounds = array<i64: 16, 72>}, {transform_indices = @transform_4, window_bounds = array<i64: 16, 128>}, {pipeline_mode = #tpu.pipeline_mode<synchronous>, transform_indices = @transform_5, window_bounds = array<i64: 16, 1>}, {pipeline_mode = #tpu.pipeline_mode<synchronous>, transform_indices = @transform_6, window_bounds = array<i64: 16, 1>}]} {
    %c0 = arith.constant 0 : index
    %c0_0 = arith.constant 0 : index
    %0 = vector.load %arg1[%c0, %c0_0] : memref<72x128xf32, #tpu.memory_space<vmem>>, vector<72x128xf32>
    %c0_1 = arith.constant 0 : index
    %c0_2 = arith.constant 0 : index
    %1 = vector.load %arg2[%c0_1, %c0_2] : memref<72x1xf32, #tpu.memory_space<vmem>>, vector<72x1xf32>
    %2 = vector.broadcast %1 : vector<72x1xf32> to vector<72x128xf32>
    %3 = arith.mulf %0, %2 : vector<72x128xf32>
    %c0_3 = arith.constant 0 : index
    %c0_4 = arith.constant 0 : index
    %4 = vector.load %arg3[%c0_3, %c0_4] : memref<72x1xf32, #tpu.memory_space<vmem>>, vector<72x1xf32>
    %5 = vector.broadcast %4 : vector<72x1xf32> to vector<72x128xf32>
    %6 = arith.addf %3, %5 : vector<72x128xf32>
    %cst = arith.constant 5.000000e-01 : f32
    %7 = vector.broadcast %cst : f32 to vector<72x128xf32>
    %8 = arith.mulf %7, %6 : vector<72x128xf32>
    %cst_5 = arith.constant 0.707106769 : f32
    %9 = vector.broadcast %cst_5 : f32 to vector<72x128xf32>
    %10 = arith.mulf %6, %9 : vector<72x128xf32>
    %11 = math.erf %10 : vector<72x128xf32>
    %cst_6 = arith.constant 1.000000e+00 : f32
    %12 = vector.broadcast %cst_6 : f32 to vector<72x128xf32>
    %13 = arith.addf %12, %11 : vector<72x128xf32>
    %14 = arith.mulf %8, %13 : vector<72x128xf32>
    %c128_i32 = arith.constant 128 : i32
    %15 = arith.muli %arg0, %c128_i32 : i32
    %16 = tpu.iota {dimensions = array<i32: 1>} : vector<72x128xi32>
    %17 = vector.broadcast %15 : i32 to vector<72x128xi32>
    %18 = arith.addi %17, %16 : vector<72x128xi32>
    %c8_i32 = arith.constant 8 : i32
    %19 = vector.broadcast %c8_i32 : i32 to vector<72x128xi32>
    %20 = arith.cmpi slt, %18, %19 : vector<72x128xi32>
    %cst_7 = arith.constant 0.000000e+00 : f32
    %21 = vector.broadcast %cst_7 : f32 to vector<72x128xf32>
    %22 = arith.select %20, %14, %21 : vector<72x128xi1>, vector<72x128xf32>
    %c0_8 = arith.constant 0 : index
    %c0_9 = arith.constant 0 : index
    %23 = vector.load %arg4[%c0_8, %c0_9] : memref<16x72xf32, #tpu.memory_space<vmem>>, vector<16x72xf32>
    %24 = arith.truncf %23 : vector<16x72xf32> to vector<16x72xbf16>
    %25 = arith.truncf %22 : vector<72x128xf32> to vector<72x128xbf16>
    %cst_10 = arith.constant dense<0.000000e+00> : vector<16x128xf32>
    %26 = tpu.matmul %24, %25, %cst_10 {dimension_numbers = #tpu.dot_dimension_numbers<[1], [0], [0], [1], [0, 0, 1, 1], [], []>} : vector<16x72xbf16>, vector<72x128xbf16>, vector<16x128xf32> -> vector<16x128xf32>
    %c0_11 = arith.constant 0 : index
    %c0_12 = arith.constant 0 : index
    %27 = vector.load %arg5[%c0_11, %c0_12] : memref<16x128xf32, #tpu.memory_space<vmem>>, vector<16x128xf32>
    tpu.vector_store %arg5[%c0_11, %c0_12], %26 {strides = array<i32>} : memref<16x128xf32, #tpu.memory_space<vmem>>, vector<16x128xf32>,
    %cst_13 = arith.constant dense<0.000000e+00> : vector<16xf32>
    %28 = vector.multi_reduction <add>, %26, %cst_13 [1] : vector<16x128xf32> to vector<16xf32>
    %29 = vector.shape_cast %28 : vector<16xf32> to vector<16x1xf32>
    %30 = arith.mulf %26, %26 : vector<16x128xf32>
    %cst_14 = arith.constant dense<0.000000e+00> : vector<16xf32>
    %31 = vector.multi_reduction <add>, %30, %cst_14 [1] : vector<16x128xf32> to vector<16xf32>
    %32 = vector.shape_cast %31 : vector<16xf32> to vector<16x1xf32>
    %c0_i32 = arith.constant 0 : i32
    %33 = arith.cmpi eq, %arg0, %c0_i32 : i32
    %34 = arith.extui %33 : i1 to i32
    %c0_i32_15 = arith.constant 0 : i32
    %35 = arith.cmpi ne, %34, %c0_i32_15 : i32
    scf.if %35 {
      %c0_18 = arith.constant 0 : index
      %c0_19 = arith.constant 0 : index
      %39 = vector.load %arg6[%c0_18, %c0_19] : memref<16x1xf32, #tpu.memory_space<vmem>>, vector<16x1xf32>
      tpu.vector_store %arg6[%c0_18, %c0_19], %29 {strides = array<i32>} : memref<16x1xf32, #tpu.memory_space<vmem>>, vector<16x1xf32>,
      %c0_20 = arith.constant 0 : index
      %c0_21 = arith.constant 0 : index
      %40 = vector.load %arg7[%c0_20, %c0_21] : memref<16x1xf32, #tpu.memory_space<vmem>>, vector<16x1xf32>
      tpu.vector_store %arg7[%c0_20, %c0_21], %32 {strides = array<i32>} : memref<16x1xf32, #tpu.memory_space<vmem>>, vector<16x1xf32>,
    } else {
    }
    %c0_i32_16 = arith.constant 0 : i32
    %36 = arith.cmpi ne, %arg0, %c0_i32_16 : i32
    %37 = arith.extui %36 : i1 to i32
    %c0_i32_17 = arith.constant 0 : i32
    %38 = arith.cmpi ne, %37, %c0_i32_17 : i32
    scf.if %38 {
      %c0_18 = arith.constant 0 : index
      %c0_19 = arith.constant 0 : index
      %39 = vector.load %arg6[%c0_18, %c0_19] : memref<16x1xf32, #tpu.memory_space<vmem>>, vector<16x1xf32>
      %40 = arith.addf %39, %29 : vector<16x1xf32>
      %c0_20 = arith.constant 0 : index
      %c0_21 = arith.constant 0 : index
      %41 = vector.load %arg6[%c0_20, %c0_21] : memref<16x1xf32, #tpu.memory_space<vmem>>, vector<16x1xf32>
      tpu.vector_store %arg6[%c0_20, %c0_21], %40 {strides = array<i32>} : memref<16x1xf32, #tpu.memory_space<vmem>>, vector<16x1xf32>,
      %c0_22 = arith.constant 0 : index
      %c0_23 = arith.constant 0 : index
      %42 = vector.load %arg7[%c0_22, %c0_23] : memref<16x1xf32, #tpu.memory_space<vmem>>, vector<16x1xf32>
      %43 = arith.addf %42, %32 : vector<16x1xf32>
      %c0_24 = arith.constant 0 : index
      %c0_25 = arith.constant 0 : index
      %44 = vector.load %arg7[%c0_24, %c0_25] : memref<16x1xf32, #tpu.memory_space<vmem>>, vector<16x1xf32>
      tpu.vector_store %arg7[%c0_24, %c0_25], %43 {strides = array<i32>} : memref<16x1xf32, #tpu.memory_space<vmem>>, vector<16x1xf32>,
    } else {
    }
    return
  }
  func.func @transform_0(%arg0: i32) -> (i32, i32) {
    %c0_i32 = arith.constant 0 : i32
    %c0_i32_0 = arith.constant 0 : i32
    return %c0_i32, %arg0 : i32, i32
  }
  func.func @transform_1(%arg0: i32) -> (i32, i32) {
    %c0_i32 = arith.constant 0 : i32
    %c0_i32_0 = arith.constant 0 : i32
    %c0_i32_1 = arith.constant 0 : i32
    return %c0_i32, %c0_i32_0 : i32, i32
  }
  func.func @transform_2(%arg0: i32) -> (i32, i32) {
    %c0_i32 = arith.constant 0 : i32
    %c0_i32_0 = arith.constant 0 : i32
    %c0_i32_1 = arith.constant 0 : i32
    return %c0_i32, %c0_i32_0 : i32, i32
  }
  func.func @transform_3(%arg0: i32) -> (i32, i32) {
    %c0_i32 = arith.constant 0 : i32
    %c0_i32_0 = arith.constant 0 : i32
    %c0_i32_1 = arith.constant 0 : i32
    return %c0_i32, %c0_i32_0 : i32, i32
  }
  func.func @transform_4(%arg0: i32) -> (i32, i32) {
    %c0_i32 = arith.constant 0 : i32
    %c0_i32_0 = arith.constant 0 : i32
    return %c0_i32, %arg0 : i32, i32
  }
  func.func @transform_5(%arg0: i32) -> (i32, i32) {
    %c0_i32 = arith.constant 0 : i32
    %c0_i32_0 = arith.constant 0 : i32
    %c0_i32_1 = arith.constant 0 : i32
    return %c0_i32, %c0_i32_0 : i32, i32
  }
  func.func @transform_6(%arg0: i32) -> (i32, i32) {
    %c0_i32 = arith.constant 0 : i32
    %c0_i32_0 = arith.constant 0 : i32
    %c0_i32_1 = arith.constant 0 : i32
    return %c0_i32, %c0_i32_0 : i32, i32
  }
}

module attributes {stable_mosaic.version = 11 : i64} {
  func.func @kernel(%arg0: i32, %arg1: memref<16x128xf32, #tpu.memory_space<vmem>>, %arg2: memref<16x1xf32, #tpu.memory_space<vmem>>, %arg3: memref<16x1xf32, #tpu.memory_space<vmem>>, %arg4: memref<32x16xf32, #tpu.memory_space<vmem>>, %arg5: memref<32x128xf32, #tpu.memory_space<vmem>>, %arg6: memref<32x1xf32, #tpu.memory_space<vmem>>, %arg7: memref<32x1xf32, #tpu.memory_space<vmem>>) attributes {dimension_semantics = [#tpu.dimension_semantics<arbitrary>], iteration_bounds = array<i64: 1>, scalar_prefetch = 0 : i64, scratch_operands = 0 : i64, tpu.core_type = #tpu.core_type<tc>, window_params = [{transform_indices = @transform_0, window_bounds = array<i64: 16, 128>}, {pipeline_mode = #tpu.pipeline_mode<synchronous>, transform_indices = @transform_1, window_bounds = array<i64: 16, 1>}, {pipeline_mode = #tpu.pipeline_mode<synchronous>, transform_indices = @transform_2, window_bounds = array<i64: 16, 1>}, {pipeline_mode = #tpu.pipeline_mode<synchronous>, transform_indices = @transform_3, window_bounds = array<i64: 32, 16>}, {transform_indices = @transform_4, window_bounds = array<i64: 32, 128>}, {pipeline_mode = #tpu.pipeline_mode<synchronous>, transform_indices = @transform_5, window_bounds = array<i64: 32, 1>}, {pipeline_mode = #tpu.pipeline_mode<synchronous>, transform_indices = @transform_6, window_bounds = array<i64: 32, 1>}]} {
    %c0 = arith.constant 0 : index
    %c0_0 = arith.constant 0 : index
    %0 = vector.load %arg1[%c0, %c0_0] : memref<16x128xf32, #tpu.memory_space<vmem>>, vector<16x128xf32>
    %c0_1 = arith.constant 0 : index
    %c0_2 = arith.constant 0 : index
    %1 = vector.load %arg2[%c0_1, %c0_2] : memref<16x1xf32, #tpu.memory_space<vmem>>, vector<16x1xf32>
    %2 = vector.broadcast %1 : vector<16x1xf32> to vector<16x128xf32>
    %3 = arith.mulf %0, %2 : vector<16x128xf32>
    %c0_3 = arith.constant 0 : index
    %c0_4 = arith.constant 0 : index
    %4 = vector.load %arg3[%c0_3, %c0_4] : memref<16x1xf32, #tpu.memory_space<vmem>>, vector<16x1xf32>
    %5 = vector.broadcast %4 : vector<16x1xf32> to vector<16x128xf32>
    %6 = arith.addf %3, %5 : vector<16x128xf32>
    %cst = arith.constant 5.000000e-01 : f32
    %7 = vector.broadcast %cst : f32 to vector<16x128xf32>
    %8 = arith.mulf %7, %6 : vector<16x128xf32>
    %cst_5 = arith.constant 0.707106769 : f32
    %9 = vector.broadcast %cst_5 : f32 to vector<16x128xf32>
    %10 = arith.mulf %6, %9 : vector<16x128xf32>
    %11 = math.erf %10 : vector<16x128xf32>
    %cst_6 = arith.constant 1.000000e+00 : f32
    %12 = vector.broadcast %cst_6 : f32 to vector<16x128xf32>
    %13 = arith.addf %12, %11 : vector<16x128xf32>
    %14 = arith.mulf %8, %13 : vector<16x128xf32>
    %c128_i32 = arith.constant 128 : i32
    %15 = arith.muli %arg0, %c128_i32 : i32
    %16 = tpu.iota {dimensions = array<i32: 1>} : vector<16x128xi32>
    %17 = vector.broadcast %15 : i32 to vector<16x128xi32>
    %18 = arith.addi %17, %16 : vector<16x128xi32>
    %c8_i32 = arith.constant 8 : i32
    %19 = vector.broadcast %c8_i32 : i32 to vector<16x128xi32>
    %20 = arith.cmpi slt, %18, %19 : vector<16x128xi32>
    %cst_7 = arith.constant 0.000000e+00 : f32
    %21 = vector.broadcast %cst_7 : f32 to vector<16x128xf32>
    %22 = arith.select %20, %14, %21 : vector<16x128xi1>, vector<16x128xf32>
    %c0_8 = arith.constant 0 : index
    %c0_9 = arith.constant 0 : index
    %23 = vector.load %arg4[%c0_8, %c0_9] : memref<32x16xf32, #tpu.memory_space<vmem>>, vector<32x16xf32>
    %24 = arith.truncf %23 : vector<32x16xf32> to vector<32x16xbf16>
    %25 = arith.truncf %22 : vector<16x128xf32> to vector<16x128xbf16>
    %cst_10 = arith.constant dense<0.000000e+00> : vector<32x128xf32>
    %26 = tpu.matmul %24, %25, %cst_10 {dimension_numbers = #tpu.dot_dimension_numbers<[1], [0], [0], [1], [0, 0, 1, 1], [], []>} : vector<32x16xbf16>, vector<16x128xbf16>, vector<32x128xf32> -> vector<32x128xf32>
    %c0_11 = arith.constant 0 : index
    %c0_12 = arith.constant 0 : index
    %27 = vector.load %arg5[%c0_11, %c0_12] : memref<32x128xf32, #tpu.memory_space<vmem>>, vector<32x128xf32>
    tpu.vector_store %arg5[%c0_11, %c0_12], %26 {strides = array<i32>} : memref<32x128xf32, #tpu.memory_space<vmem>>, vector<32x128xf32>,
    %cst_13 = arith.constant dense<0.000000e+00> : vector<32xf32>
    %28 = vector.multi_reduction <add>, %26, %cst_13 [1] : vector<32x128xf32> to vector<32xf32>
    %29 = vector.shape_cast %28 : vector<32xf32> to vector<32x1xf32>
    %30 = arith.mulf %26, %26 : vector<32x128xf32>
    %cst_14 = arith.constant dense<0.000000e+00> : vector<32xf32>
    %31 = vector.multi_reduction <add>, %30, %cst_14 [1] : vector<32x128xf32> to vector<32xf32>
    %32 = vector.shape_cast %31 : vector<32xf32> to vector<32x1xf32>
    %c0_i32 = arith.constant 0 : i32
    %33 = arith.cmpi eq, %arg0, %c0_i32 : i32
    %34 = arith.extui %33 : i1 to i32
    %c0_i32_15 = arith.constant 0 : i32
    %35 = arith.cmpi ne, %34, %c0_i32_15 : i32
    scf.if %35 {
      %c0_18 = arith.constant 0 : index
      %c0_19 = arith.constant 0 : index
      %39 = vector.load %arg6[%c0_18, %c0_19] : memref<32x1xf32, #tpu.memory_space<vmem>>, vector<32x1xf32>
      tpu.vector_store %arg6[%c0_18, %c0_19], %29 {strides = array<i32>} : memref<32x1xf32, #tpu.memory_space<vmem>>, vector<32x1xf32>,
      %c0_20 = arith.constant 0 : index
      %c0_21 = arith.constant 0 : index
      %40 = vector.load %arg7[%c0_20, %c0_21] : memref<32x1xf32, #tpu.memory_space<vmem>>, vector<32x1xf32>
      tpu.vector_store %arg7[%c0_20, %c0_21], %32 {strides = array<i32>} : memref<32x1xf32, #tpu.memory_space<vmem>>, vector<32x1xf32>,
    } else {
    }
    %c0_i32_16 = arith.constant 0 : i32
    %36 = arith.cmpi ne, %arg0, %c0_i32_16 : i32
    %37 = arith.extui %36 : i1 to i32
    %c0_i32_17 = arith.constant 0 : i32
    %38 = arith.cmpi ne, %37, %c0_i32_17 : i32
    scf.if %38 {
      %c0_18 = arith.constant 0 : index
      %c0_19 = arith.constant 0 : index
      %39 = vector.load %arg6[%c0_18, %c0_19] : memref<32x1xf32, #tpu.memory_space<vmem>>, vector<32x1xf32>
      %40 = arith.addf %39, %29 : vector<32x1xf32>
      %c0_20 = arith.constant 0 : index
      %c0_21 = arith.constant 0 : index
      %41 = vector.load %arg6[%c0_20, %c0_21] : memref<32x1xf32, #tpu.memory_space<vmem>>, vector<32x1xf32>
      tpu.vector_store %arg6[%c0_20, %c0_21], %40 {strides = array<i32>} : memref<32x1xf32, #tpu.memory_space<vmem>>, vector<32x1xf32>,
      %c0_22 = arith.constant 0 : index
      %c0_23 = arith.constant 0 : index
      %42 = vector.load %arg7[%c0_22, %c0_23] : memref<32x1xf32, #tpu.memory_space<vmem>>, vector<32x1xf32>
      %43 = arith.addf %42, %32 : vector<32x1xf32>
      %c0_24 = arith.constant 0 : index
      %c0_25 = arith.constant 0 : index
      %44 = vector.load %arg7[%c0_24, %c0_25] : memref<32x1xf32, #tpu.memory_space<vmem>>, vector<32x1xf32>
      tpu.vector_store %arg7[%c0_24, %c0_25], %43 {strides = array<i32>} : memref<32x1xf32, #tpu.memory_space<vmem>>, vector<32x1xf32>,
    } else {
    }
    return
  }
  func.func @transform_0(%arg0: i32) -> (i32, i32) {
    %c0_i32 = arith.constant 0 : i32
    %c0_i32_0 = arith.constant 0 : i32
    return %c0_i32, %arg0 : i32, i32
  }
  func.func @transform_1(%arg0: i32) -> (i32, i32) {
    %c0_i32 = arith.constant 0 : i32
    %c0_i32_0 = arith.constant 0 : i32
    %c0_i32_1 = arith.constant 0 : i32
    return %c0_i32, %c0_i32_0 : i32, i32
  }
  func.func @transform_2(%arg0: i32) -> (i32, i32) {
    %c0_i32 = arith.constant 0 : i32
    %c0_i32_0 = arith.constant 0 : i32
    %c0_i32_1 = arith.constant 0 : i32
    return %c0_i32, %c0_i32_0 : i32, i32
  }
  func.func @transform_3(%arg0: i32) -> (i32, i32) {
    %c0_i32 = arith.constant 0 : i32
    %c0_i32_0 = arith.constant 0 : i32
    %c0_i32_1 = arith.constant 0 : i32
    return %c0_i32, %c0_i32_0 : i32, i32
  }
  func.func @transform_4(%arg0: i32) -> (i32, i32) {
    %c0_i32 = arith.constant 0 : i32
    %c0_i32_0 = arith.constant 0 : i32
    return %c0_i32, %arg0 : i32, i32
  }
  func.func @transform_5(%arg0: i32) -> (i32, i32) {
    %c0_i32 = arith.constant 0 : i32
    %c0_i32_0 = arith.constant 0 : i32
    %c0_i32_1 = arith.constant 0 : i32
    return %c0_i32, %c0_i32_0 : i32, i32
  }
  func.func @transform_6(%arg0: i32) -> (i32, i32) {
    %c0_i32 = arith.constant 0 : i32
    %c0_i32_0 = arith.constant 0 : i32
    %c0_i32_1 = arith.constant 0 : i32
    return %c0_i32, %c0_i32_0 : i32, i32
  }
}

</mosaic_0001>

<llo_original>
// kernel: tile.18
$region0: #{tile.18}
  #allocation0 [shape = 's32[1]{0}', space=sflag, size = 0x4, scoped, tag = 'scoped memory for tile.18']
  %s0 = inlined_call_operand.vmem [shape: f32[4], index: 0, kind: input, shape index: {}]
  %s1 = inlined_call_operand.vmem [shape: f32[9,4], index: 1, kind: output, shape index: {}]
  // Predicated region
  $region2: #{tile.18} parent=0 // pred_check
    _
  $region3: #{tile.18} parent=0 // pred_check_branch
    %3 = sbr.rel (0) target = $region5
  $region4: #{tile.18} parent=0 // pred_region
    _
  $region5: #{tile.18} parent=0 // pred_fallthru
    _
  %v4 = vld [vmem:[%s0] ss:$0 sm:$0xff]
  %5 = vst [vmem:[%s1] sm:$0xff] %v4
  %s6 = scalar_lea.vmem %s1, 8
  %7 = vst [vmem:[%s6] sm:$0xff] %v4

// kernel: tile.0
$region0: #{tile.0}
  %s0 = inlined_call_operand.vmem [shape: f32[9,4], index: 0, kind: input, shape index: {}]
  %s1 = inlined_call_operand.vmem [shape: f32[36,1], index: 1, kind: output, shape index: {}]
  %v2 = vld [vmem:[%s0] sm:$0xff]
  %vm3 = vcmask 7168
  %4 = vst.msk [vmem:[%s1] ss:$4 sm:$0xff] %vm3, %v2
  %s5 = scalar_lea.vmem %s0, 8
  %v6 = vld [vmem:[%s5] sm:$0x1]
  %vm7 = vcmask 7168
  %s8 = scalar_lea.vmem %s1, 32
  %9 = vst.msk [vmem:[%s8] sm:$0x1] %vm7, %v6
  %v10 = vld [vmem:[%s0] sm:$0xff]
  %11 = vrot.lane.b32.xlu0 %v10, 127
  %v12 = vpop.permute.xlu0 %11
  %vm13 = vcmask 7168
  %s14 = scalar_lea.vmem %s1, 1
  %15 = vst.msk [vmem:[%s14] ss:$4 sm:$0xff] %vm13, %v12
  %s16 = scalar_lea.vmem %s0, 8
  %v17 = vld [vmem:[%s16] sm:$0x1]
  %18 = vrot.lane.b32.xlu0 %v17, 127
  %v19 = vpop.permute.xlu0 %18
  %vm20 = vcmask 7168
  %s21 = scalar_lea.vmem %s1, 33
  %22 = vst.msk [vmem:[%s21] sm:$0x1] %vm20, %v19
  %v23 = vld [vmem:[%s0] sm:$0xff]
  %24 = vrot.lane.b32.xlu0 %v23, 126
  %v25 = vpop.permute.xlu0 %24
  %vm26 = vcmask 7168
  %s27 = scalar_lea.vmem %s1, 2
  %28 = vst.msk [vmem:[%s27] ss:$4 sm:$0xff] %vm26, %v25
  %s29 = scalar_lea.vmem %s0, 8
  %v30 = vld [vmem:[%s29] sm:$0x1]
  %31 = vrot.lane.b32.xlu0 %v30, 126
  %v32 = vpop.permute.xlu0 %31
  %vm33 = vcmask 7168
  %s34 = scalar_lea.vmem %s1, 34
  %35 = vst.msk [vmem:[%s34] sm:$0x1] %vm33, %v32
  %v36 = vld [vmem:[%s0] sm:$0xff]
  %37 = vrot.lane.b32.xlu0 %v36, 125
  %v38 = vpop.permute.xlu0 %37
  %vm39 = vcmask 7168
  %s40 = scalar_lea.vmem %s1, 3
  %41 = vst.msk [vmem:[%s40] ss:$4 sm:$0xff] %vm39, %v38
  %s42 = scalar_lea.vmem %s0, 8
  %v43 = vld [vmem:[%s42] sm:$0x1]
  %44 = vrot.lane.b32.xlu0 %v43, 125
  %v45 = vpop.permute.xlu0 %44
  %vm46 = vcmask 7168
  %s47 = scalar_lea.vmem %s1, 35
  %48 = vst.msk [vmem:[%s47] sm:$0x1] %vm46, %v45

// kernel: _lambda_.5
$region0: #{_lambda_.5}
  #allocation0 [shape = 'u32[]', space=smem, size = 0x4, offset = 0x4, fixed_abs, tag = 'smem constant byte address 0x4 - core index']
  #allocation1 [shape = 'u32[72,128]{1,0:T(1,128)}', space=vmem, size = 0x9000, scoped, tag = 'internal scratch']
  %s0 = inlined_call_operand.vmem [shape: f32[9,128], index: 0, kind: input, shape index: {}]
  %s1 = inlined_call_operand.vmem [shape: f32[4,9], index: 1, kind: input, shape index: {}]
  %s2 = inlined_call_operand.vmem [shape: f32[4,128], index: 2, kind: output, shape index: {0}]
  %s3 = inlined_call_operand.vmem [shape: f32[4,1], index: 3, kind: output, shape index: {1}]
  %s4 = inlined_call_operand.vmem [shape: f32[4,1], index: 4, kind: output, shape index: {2}]
  %5 = xla_tuple %s2, %s3, %s4
  %s6 = sld [smem:[#allocation0]]
  $region42: #{_lambda_.5} parent=0
    _
  %s8 = ssub.s32 1, %s6
  %s9 = scalar_select 0, %s8, %s6
  // Predicated region
  $region2: #{_lambda_.5} parent=0 // pred_check
    _
  $region3: #{_lambda_.5} parent=0 // pred_check_branch
    %11 = sbr.rel (0) target = $region5
  $region4: #{_lambda_.5} parent=0 // pred_region
    _
  $region5: #{_lambda_.5} parent=0 // pred_fallthru
    _
  // Predicated region
  $region6: #{_lambda_.5} parent=0 // pred_check
    _
  $region7: #{_lambda_.5} parent=0 // pred_check_branch
    %13 = sbr.rel (0) target = $region9
  $region8: #{_lambda_.5} parent=0 // pred_region
    _
  $region9: #{_lambda_.5} parent=0 // pred_fallthru
    _
  %v15 = vld [vmem:[%s0] sm:$0xff]
  %v16 = vld [vmem:[%s0 + $0x8] sm:$0x1]
  %v17 = vld [vmem:[%s1] sm:$0xf]
  %v18 = vpack.c.bf16 %v17, %v17
  %v19 = vpack.c.bf16 %v16, %v15
  %vm20 = vcmask 72704
  %v22 = vsel %vm20, %v18, 0
  %vm24 = vcmask 1043456
  %vm25 = vcmask 1044480
  %v26 = vsel %vm24, 4294967295, 65535
  %v27 = vsel %vm25, %v26, 0
  %v29 = vand.u32 %v19, %v27
  %31 = vmatpush.bf16.msra.mxu0 0
  %32 = vmatpush.bf16.msra.mxu0 0
  %33 = vmatpush.bf16.msra.mxu0 0
  %34 = vmatpush.bf16.msra.mxu0 0
  %35 = vmatpush.bf16.msra.mxu0 0
  %36 = vmatpush.bf16.msra.mxu0 0
  %37 = vmatpush.bf16.msra.mxu0 0
  %38 = vmatpush.bf16.msra.mxu0 %v29
  %39 = vmatmul.bf16.gmra.mxu0 %v22
  %v40 = vpop.f32.mrf.mxu0
  %v41 = vadd.f32 0.0, %v40
  %v42 = vpop.f32.mrf.mxu0
  %43 = vdwg.mxu0
  %44 = vst [vmem:[%s2] sm:$0xf] %v41
  %v45 = vsel %vm24, %v41, 0.0
  %46 = vadd.xlane.f32.xlu0 %v45
  %v47 = vpop.xlane.xlu0 %46
  %v48 = vmul.f32 %v41, %v41
  %v49 = vsel %vm24, %v48, 0.0
  %50 = vadd.xlane.f32.xlu0 %v49
  %v51 = vpop.xlane.xlu0 %50
  %p52 = scmp.eq.s32.totalorder 0, 0
  // Predicated region
  $region10: #{_lambda_.5} parent=0 // pred_check
    %p53 = pneg %p52
  $region11: #{_lambda_.5} parent=0 // pred_check_branch
    %55 = sbr.rel (%p53) target = $region13
  $region12: #{_lambda_.5} parent=0 // pred_region
    %vm56 = vcmask 3072
    %57 = vst.msk [vmem:[%s3] sm:$0xf] %vm56, %v47
    %58 = vst.msk [vmem:[%s4] sm:$0xf] %vm56, %v51
  $region13: #{_lambda_.5} parent=0 // pred_fallthru
    _
  %p59 = scmp.ne.s32.totalorder 0, 0
  // Predicated region
  $region14: #{_lambda_.5} parent=0 // pred_check
    %p60 = pneg %p59
  $region15: #{_lambda_.5} parent=0 // pred_check_branch
    %62 = sbr.rel (%p60) target = $region17
  $region16: #{_lambda_.5} parent=0 // pred_region
    %v63 = vld [vmem:[%s3] sm:$0xf]
    %v64 = vadd.f32 %v63, %v47
    %vm65 = vcmask 3072
    %66 = vst.msk [vmem:[%s3] sm:$0xf] %vm65, %v64
    %v67 = vld [vmem:[%s4] sm:$0xf]
    %v68 = vadd.f32 %v67, %v51
    %69 = vst.msk [vmem:[%s4] sm:$0xf] %vm65, %v68
  $region17: #{_lambda_.5} parent=0 // pred_fallthru
    _
  // Predicated region
  $region18: #{_lambda_.5} parent=0 // pred_check
    _
  $region19: #{_lambda_.5} parent=0 // pred_check_branch
    %71 = sbr.rel (0) target = $region21
  $region20: #{_lambda_.5} parent=0 // pred_region
    _
  $region21: #{_lambda_.5} parent=0 // pred_fallthru
    _
  // Predicated region
  $region22: #{_lambda_.5} parent=0 // pred_check
    _
  $region23: #{_lambda_.5} parent=0 // pred_check_branch
    %73 = sbr.rel (0) target = $region25
  $region24: #{_lambda_.5} parent=0 // pred_region
    _
  $region25: #{_lambda_.5} parent=0 // pred_fallthru
    _
  // Predicated region
  $region26: #{_lambda_.5} parent=0 // pred_check
    _
  $region27: #{_lambda_.5} parent=0 // pred_check_branch
    %75 = sbr.rel (0) target = $region29
  $region28: #{_lambda_.5} parent=0 // pred_region
    _
  $region29: #{_lambda_.5} parent=0 // pred_fallthru
    _
  // Predicated region
  $region30: #{_lambda_.5} parent=0 // pred_check
    _
  $region31: #{_lambda_.5} parent=0 // pred_check_branch
    %77 = sbr.rel (0) target = $region33
  $region32: #{_lambda_.5} parent=0 // pred_region
    _
  $region33: #{_lambda_.5} parent=0 // pred_fallthru
    _
  // Predicated region
  $region34: #{_lambda_.5} parent=0 // pred_check
    _
  $region35: #{_lambda_.5} parent=0 // pred_check_branch
    %79 = sbr.rel (0) target = $region37
  $region36: #{_lambda_.5} parent=0 // pred_region
    _
  $region37: #{_lambda_.5} parent=0 // pred_fallthru
    _
  // Predicated region
  $region38: #{_lambda_.5} parent=0 // pred_check
    _
  $region39: #{_lambda_.5} parent=0 // pred_check_branch
    %81 = sbr.rel (0) target = $region41
  $region40: #{_lambda_.5} parent=0 // pred_region
    _
  $region41: #{_lambda_.5} parent=0 // pred_fallthru
    _

// kernel: tile.26
$region0: #{tile.26}
  #allocation0 [shape = 's32[1]{0}', space=sflag, size = 0x4, scoped, tag = 'scoped memory for tile.26']
  %s0 = inlined_call_operand.vmem [shape: f32[8], index: 0, kind: input, shape index: {}]
  %s1 = inlined_call_operand.vmem [shape: f32[9,8], index: 1, kind: output, shape index: {}]
  // Predicated region
  $region2: #{tile.26} parent=0 // pred_check
    _
  $region3: #{tile.26} parent=0 // pred_check_branch
    %3 = sbr.rel (0) target = $region5
  $region4: #{tile.26} parent=0 // pred_region
    _
  $region5: #{tile.26} parent=0 // pred_fallthru
    _
  %v4 = vld [vmem:[%s0] ss:$0 sm:$0xff]
  %5 = vst [vmem:[%s1] sm:$0xff] %v4
  %s6 = scalar_lea.vmem %s1, 8
  %7 = vst [vmem:[%s6] sm:$0xff] %v4

// kernel: tile.2
$region0: #{tile.2}
  %s0 = inlined_call_operand.vmem [shape: f32[9,8], index: 0, kind: input, shape index: {}]
  %s1 = inlined_call_operand.vmem [shape: f32[72,1], index: 1, kind: output, shape index: {}]
  %v2 = vld [vmem:[%s0] sm:$0xff]
  %vm3 = vcmask 7168
  %4 = vst.msk [vmem:[%s1] ss:$8 sm:$0xf] %vm3, %v2
  %5 = vst.msk [vmem:[%s1] ss:$8 sm:$0xf0] %vm3, %v2
  %s6 = scalar_lea.vmem %s0, 8
  %v7 = vld [vmem:[%s6] sm:$0x1]
  %vm8 = vcmask 7168
  %s9 = scalar_lea.vmem %s1, 64
  %10 = vst.msk [vmem:[%s9] sm:$0x1] %vm8, %v7
  %v11 = vld [vmem:[%s0] sm:$0xff]
  %12 = vrot.lane.b32.xlu0 %v11, 127
  %v13 = vpop.permute.xlu0 %12
  %vm14 = vcmask 7168
  %s15 = scalar_lea.vmem %s1, 1
  %16 = vst.msk [vmem:[%s15] ss:$8 sm:$0xf] %vm14, %v13
  %s17 = scalar_lea.vmem %s1, 1
  %18 = vst.msk [vmem:[%s17] ss:$8 sm:$0xf0] %vm14, %v13
  %s19 = scalar_lea.vmem %s0, 8
  %v20 = vld [vmem:[%s19] sm:$0x1]
  %21 = vrot.lane.b32.xlu0 %v20, 127
  %v22 = vpop.permute.xlu0 %21
  %vm23 = vcmask 7168
  %s24 = scalar_lea.vmem %s1, 65
  %25 = vst.msk [vmem:[%s24] sm:$0x1] %vm23, %v22
  %v26 = vld [vmem:[%s0] sm:$0xff]
  %27 = vrot.lane.b32.xlu0 %v26, 126
  %v28 = vpop.permute.xlu0 %27
  %vm29 = vcmask 7168
  %s30 = scalar_lea.vmem %s1, 2
  %31 = vst.msk [vmem:[%s30] ss:$8 sm:$0xf] %vm29, %v28
  %s32 = scalar_lea.vmem %s1, 2
  %33 = vst.msk [vmem:[%s32] ss:$8 sm:$0xf0] %vm29, %v28
  %s34 = scalar_lea.vmem %s0, 8
  %v35 = vld [vmem:[%s34] sm:$0x1]
  %36 = vrot.lane.b32.xlu0 %v35, 126
  %v37 = vpop.permute.xlu0 %36
  %vm38 = vcmask 7168
  %s39 = scalar_lea.vmem %s1, 66
  %40 = vst.msk [vmem:[%s39] sm:$0x1] %vm38, %v37
  %v41 = vld [vmem:[%s0] sm:$0xff]
  %42 = vrot.lane.b32.xlu0 %v41, 125
  %v43 = vpop.permute.xlu0 %42
  %vm44 = vcmask 7168
  %s45 = scalar_lea.vmem %s1, 3
  %46 = vst.msk [vmem:[%s45] ss:$8 sm:$0xf] %vm44, %v43
  %s47 = scalar_lea.vmem %s1, 3
  %48 = vst.msk [vmem:[%s47] ss:$8 sm:$0xf0] %vm44, %v43
  %s49 = scalar_lea.vmem %s0, 8
  %v50 = vld [vmem:[%s49] sm:$0x1]
  %51 = vrot.lane.b32.xlu0 %v50, 125
  %v52 = vpop.permute.xlu0 %51
  %vm53 = vcmask 7168
  %s54 = scalar_lea.vmem %s1, 67
  %55 = vst.msk [vmem:[%s54] sm:$0x1] %vm53, %v52
  %v56 = vld [vmem:[%s0] sm:$0xff]
  %57 = vrot.lane.b32.xlu0 %v56, 124
  %v58 = vpop.permute.xlu0 %57
  %vm59 = vcmask 7168
  %s60 = scalar_lea.vmem %s1, 4
  %61 = vst.msk [vmem:[%s60] ss:$8 sm:$0xf] %vm59, %v58
  %s62 = scalar_lea.vmem %s1, 4
  %63 = vst.msk [vmem:[%s62] ss:$8 sm:$0xf0] %vm59, %v58
  %s64 = scalar_lea.vmem %s0, 8
  %v65 = vld [vmem:[%s64] sm:$0x1]
  %66 = vrot.lane.b32.xlu0 %v65, 124
  %v67 = vpop.permute.xlu0 %66
  %vm68 = vcmask 7168
  %s69 = scalar_lea.vmem %s1, 68
  %70 = vst.msk [vmem:[%s69] sm:$0x1] %vm68, %v67
  %v71 = vld [vmem:[%s0] sm:$0xff]
  %72 = vrot.lane.b32.xlu0 %v71, 123
  %v73 = vpop.permute.xlu0 %72
  %vm74 = vcmask 7168
  %s75 = scalar_lea.vmem %s1, 5
  %76 = vst.msk [vmem:[%s75] ss:$8 sm:$0xf] %vm74, %v73
  %s77 = scalar_lea.vmem %s1, 5
  %78 = vst.msk [vmem:[%s77] ss:$8 sm:$0xf0] %vm74, %v73
  %s79 = scalar_lea.vmem %s0, 8
  %v80 = vld [vmem:[%s79] sm:$0x1]
  %81 = vrot.lane.b32.xlu0 %v80, 123
  %v82 = vpop.permute.xlu0 %81
  %vm83 = vcmask 7168
  %s84 = scalar_lea.vmem %s1, 69
  %85 = vst.msk [vmem:[%s84] sm:$0x1] %vm83, %v82
  %v86 = vld [vmem:[%s0] sm:$0xff]
  %87 = vrot.lane.b32.xlu0 %v86, 122
  %v88 = vpop.permute.xlu0 %87
  %vm89 = vcmask 7168
  %s90 = scalar_lea.vmem %s1, 6
  %91 = vst.msk [vmem:[%s90] ss:$8 sm:$0xf] %vm89, %v88
  %s92 = scalar_lea.vmem %s1, 6
  %93 = vst.msk [vmem:[%s92] ss:$8 sm:$0xf0] %vm89, %v88
  %s94 = scalar_lea.vmem %s0, 8
  %v95 = vld [vmem:[%s94] sm:$0x1]
  %96 = vrot.lane.b32.xlu0 %v95, 122
  %v97 = vpop.permute.xlu0 %96
  %vm98 = vcmask 7168
  %s99 = scalar_lea.vmem %s1, 70
  %100 = vst.msk [vmem:[%s99] sm:$0x1] %vm98, %v97
  %v101 = vld [vmem:[%s0] sm:$0xff]
  %102 = vrot.lane.b32.xlu0 %v101, 121
  %v103 = vpop.permute.xlu0 %102
  %vm104 = vcmask 7168
  %s105 = scalar_lea.vmem %s1, 7
  %106 = vst.msk [vmem:[%s105] ss:$8 sm:$0xf] %vm104, %v103
  %s107 = scalar_lea.vmem %s1, 7
  %108 = vst.msk [vmem:[%s107] ss:$8 sm:$0xf0] %vm104, %v103
  %s109 = scalar_lea.vmem %s0, 8
  %v110 = vld [vmem:[%s109] sm:$0x1]
  %111 = vrot.lane.b32.xlu0 %v110, 121
  %v112 = vpop.permute.xlu0 %111
  %vm113 = vcmask 7168
  %s114 = scalar_lea.vmem %s1, 71
  %115 = vst.msk [vmem:[%s114] sm:$0x1] %vm113, %v112

// kernel: _lambda_.6
$region0: #{_lambda_.6}
  #allocation0 [shape = 'u32[]', space=smem, size = 0x4, offset = 0x4, fixed_abs, tag = 'smem constant byte address 0x4 - core index']
  #allocation1 [shape = 'u32[72,128]{1,0:T(1,128)}', space=vmem, size = 0x9000, scoped, tag = 'internal scratch']
  %s0 = inlined_call_operand.vmem [shape: f32[36,128], index: 0, kind: input, shape index: {}]
  %s1 = inlined_call_operand.vmem [shape: f32[36,1], index: 1, kind: input, shape index: {}]
  %s2 = inlined_call_operand.vmem [shape: f32[36,1], index: 2, kind: input, shape index: {}]
  %s3 = inlined_call_operand.vmem [shape: f32[8,36], index: 3, kind: input, shape index: {}]
  %s4 = inlined_call_operand.vmem [shape: f32[8,128], index: 4, kind: output, shape index: {0}]
  %s5 = inlined_call_operand.vmem [shape: f32[8,1], index: 5, kind: output, shape index: {1}]
  %s6 = inlined_call_operand.vmem [shape: f32[8,1], index: 6, kind: output, shape index: {2}]
  %7 = xla_tuple %s4, %s5, %s6
  %s8 = sld [smem:[#allocation0]]
  $region50: #{_lambda_.6} parent=0
    _
  %s10 = ssub.s32 1, %s8
  %s11 = scalar_select 0, %s10, %s8
  // Predicated region
  $region2: #{_lambda_.6} parent=0 // pred_check
    _
  $region3: #{_lambda_.6} parent=0 // pred_check_branch
    %13 = sbr.rel (0) target = $region5
  $region4: #{_lambda_.6} parent=0 // pred_region
    _
  $region5: #{_lambda_.6} parent=0 // pred_fallthru
    _
  // Predicated region
  $region6: #{_lambda_.6} parent=0 // pred_check
    _
  $region7: #{_lambda_.6} parent=0 // pred_check_branch
    %15 = sbr.rel (0) target = $region9
  $region8: #{_lambda_.6} parent=0 // pred_region
    _
  $region9: #{_lambda_.6} parent=0 // pred_fallthru
    _
  // Predicated region
  $region10: #{_lambda_.6} parent=0 // pred_check
    _
  $region11: #{_lambda_.6} parent=0 // pred_check_branch
    %17 = sbr.rel (0) target = $region13
  $region12: #{_lambda_.6} parent=0 // pred_region
    _
  $region13: #{_lambda_.6} parent=0 // pred_fallthru
    _
  // Predicated region
  $region14: #{_lambda_.6} parent=0 // pred_check
    _
  $region15: #{_lambda_.6} parent=0 // pred_check_branch
    %19 = sbr.rel (0) target = $region17
  $region16: #{_lambda_.6} parent=0 // pred_region
    _
  $region17: #{_lambda_.6} parent=0 // pred_fallthru
    _
  %v21 = vld [vmem:[%s0] sm:$0xff]
  %v22 = vld [vmem:[%s0 + $0x8] sm:$0xff]
  %v23 = vld [vmem:[%s0 + $0x10] sm:$0xff]
  %v24 = vld [vmem:[%s0 + $0x18] sm:$0xff]
  %v25 = vld [vmem:[%s0 + $0x20] sm:$0xf]
  %v26 = vld [vmem:[%s1] sm:$0xff]
  %v27 = vld [vmem:[%s1 + $0x8] sm:$0xff]
  %v28 = vld [vmem:[%s1 + $0x10] sm:$0xff]
  %v29 = vld [vmem:[%s1 + $0x18] sm:$0xff]
  %v30 = vld [vmem:[%s1 + $0x20] sm:$0xf]
  %32 = vset.pattern.permute.xlu0 0
  %33 = vperm.xlu0 %32, %v26
  %v34 = vpop.permute.xlu0 %33
  %37 = vset.pattern.permute.xlu0 0
  %38 = vperm.xlu0 %37, %v27
  %v39 = vpop.permute.xlu0 %38
  %42 = vset.pattern.permute.xlu0 0
  %43 = vperm.xlu0 %42, %v28
  %v44 = vpop.permute.xlu0 %43
  %47 = vset.pattern.permute.xlu0 0
  %48 = vperm.xlu0 %47, %v29
  %v49 = vpop.permute.xlu0 %48
  %52 = vset.pattern.permute.xlu0 0
  %53 = vperm.xlu0 %52, %v30
  %v54 = vpop.permute.xlu0 %53
  %v56 = vmul.f32 %v21, %v34
  %v57 = vmul.f32 %v22, %v39
  %v58 = vmul.f32 %v23, %v44
  %v59 = vmul.f32 %v24, %v49
  %v60 = vmul.f32 %v25, %v54
  %v61 = vld [vmem:[%s2] sm:$0xff]
  %v62 = vld [vmem:[%s2 + $0x8] sm:$0xff]
  %v63 = vld [vmem:[%s2 + $0x10] sm:$0xff]
  %v64 = vld [vmem:[%s2 + $0x18] sm:$0xff]
  %v65 = vld [vmem:[%s2 + $0x20] sm:$0xf]
  %67 = vset.pattern.permute.xlu0 0
  %68 = vperm.xlu0 %67, %v61
  %v69 = vpop.permute.xlu0 %68
  %72 = vset.pattern.permute.xlu0 0
  %73 = vperm.xlu0 %72, %v62
  %v74 = vpop.permute.xlu0 %73
  %77 = vset.pattern.permute.xlu0 0
  %78 = vperm.xlu0 %77, %v63
  %v79 = vpop.permute.xlu0 %78
  %82 = vset.pattern.permute.xlu0 0
  %83 = vperm.xlu0 %82, %v64
  %v84 = vpop.permute.xlu0 %83
  %87 = vset.pattern.permute.xlu0 0
  %88 = vperm.xlu0 %87, %v65
  %v89 = vpop.permute.xlu0 %88
  %v91 = vadd.f32 %v56, %v69
  %v92 = vadd.f32 %v57, %v74
  %v93 = vadd.f32 %v58, %v79
  %v94 = vadd.f32 %v59, %v84
  %v95 = vadd.f32 %v60, %v89
  %v96 = vmul.f32 %v91, 0.5
  %v97 = vmul.f32 %v92, 0.5
  %v98 = vmul.f32 %v93, 0.5
  %v99 = vmul.f32 %v94, 0.5
  %v100 = vmul.f32 %v95, 0.5
  %v101 = vmul.f32 %v91, 0.70710677
  %v102 = vmul.f32 %v92, 0.70710677
  %v103 = vmul.f32 %v93, 0.70710677
  %v104 = vmul.f32 %v94, 0.70710677
  %v105 = vmul.f32 %v95, 0.70710677
  %v106 = vmul.f32 %v101, %v101
  %v107 = vmin.f32 16.0, %v106
  %v108 = vmul.f32 %v107, 2.1237322e-06
  %v109 = vadd.f32 %v108, 0.00028619796
  %v110 = vmul.f32 %v107, %v109
  %v111 = vadd.f32 %v110, 0.0036580483
  %v112 = vmul.f32 %v107, %v111
  %v113 = vadd.f32 %v112, 0.05243302
  %v114 = vmul.f32 %v107, %v113
  %v115 = vadd.f32 %v114, 0.18741608
  %v116 = vmul.f32 %v107, %v115
  %v117 = vadd.f32 %v116, 1.1283791
  %v118 = vmul.f32 %v101, %v117
  %v119 = vmul.f32 %v107, 3.8918573e-05
  %v120 = vadd.f32 %v119, 0.001143296
  %v121 = vmul.f32 %v107, %v120
  %v122 = vadd.f32 %v121, 0.014752088
  %v123 = vmul.f32 %v107, %v122
  %v124 = vadd.f32 %v123, 0.112945676
  %v125 = vmul.f32 %v107, %v124
  %v126 = vadd.f32 %v125, 0.4994258
  %v127 = vmul.f32 %v107, %v126
  %v128 = vadd.f32 %v127, 1.0
  %v129 = vrcp.pop %v128
  %v130 = vmul.f32 %v128, %v129
  %v131 = vsub.f32 1.0, %v130
  %v132 = vmul.f32 %v129, %v131
  %v133 = vadd.f32 %v129, %v132
  %vm134 = vweird.f32 %v128
  %vm135 = vweird.f32 %v129
  %vm136 = vmor %vm134, %vm135
  %v137 = vsel %vm136, %v129, %v133
  %v138 = vand.u32 2147483647, %v128
  %vm139 = vcmp.eq.f32.partialorder %v138, 8.507059e+37
  %v140 = vand.u32 %v128, 2147483648
  %v141 = vor.u32 1.1754944e-38, %v140
  %v142 = vsel %vm139, %v141, %v137
  %v143 = vmul.f32 %v118, %v142
  %v144 = vmin.f32 %v143, 1.0
  %v145 = vmax.f32 %v144, -1.0
  %v146 = vmul.f32 %v102, %v102
  %v147 = vmin.f32 16.0, %v146
  %v148 = vmul.f32 %v147, 2.1237322e-06
  %v149 = vadd.f32 %v148, 0.00028619796
  %v150 = vmul.f32 %v147, %v149
  %v151 = vadd.f32 %v150, 0.0036580483
  %v152 = vmul.f32 %v147, %v151
  %v153 = vadd.f32 %v152, 0.05243302
  %v154 = vmul.f32 %v147, %v153
  %v155 = vadd.f32 %v154, 0.18741608
  %v156 = vmul.f32 %v147, %v155
  %v157 = vadd.f32 %v156, 1.1283791
  %v158 = vmul.f32 %v102, %v157
  %v159 = vmul.f32 %v147, 3.8918573e-05
  %v160 = vadd.f32 %v159, 0.001143296
  %v161 = vmul.f32 %v147, %v160
  %v162 = vadd.f32 %v161, 0.014752088
  %v163 = vmul.f32 %v147, %v162
  %v164 = vadd.f32 %v163, 0.112945676
  %v165 = vmul.f32 %v147, %v164
  %v166 = vadd.f32 %v165, 0.4994258
  %v167 = vmul.f32 %v147, %v166
  %v168 = vadd.f32 %v167, 1.0
  %v169 = vrcp.pop %v168
  %v170 = vmul.f32 %v168, %v169
  %v171 = vsub.f32 1.0, %v170
  %v172 = vmul.f32 %v169, %v171
  %v173 = vadd.f32 %v169, %v172
  %vm174 = vweird.f32 %v168
  %vm175 = vweird.f32 %v169
  %vm176 = vmor %vm174, %vm175
  %v177 = vsel %vm176, %v169, %v173
  %v178 = vand.u32 2147483647, %v168
  %vm179 = vcmp.eq.f32.partialorder %v178, 8.507059e+37
  %v180 = vand.u32 %v168, 2147483648
  %v181 = vor.u32 1.1754944e-38, %v180
  %v182 = vsel %vm179, %v181, %v177
  %v183 = vmul.f32 %v158, %v182
  %v184 = vmin.f32 %v183, 1.0
  %v185 = vmax.f32 %v184, -1.0
  %v186 = vmul.f32 %v103, %v103
  %v187 = vmin.f32 16.0, %v186
  %v188 = vmul.f32 %v187, 2.1237322e-06
  %v189 = vadd.f32 %v188, 0.00028619796
  %v190 = vmul.f32 %v187, %v189
  %v191 = vadd.f32 %v190, 0.0036580483
  %v192 = vmul.f32 %v187, %v191
  %v193 = vadd.f32 %v192, 0.05243302
  %v194 = vmul.f32 %v187, %v193
  %v195 = vadd.f32 %v194, 0.18741608
  %v196 = vmul.f32 %v187, %v195
  %v197 = vadd.f32 %v196, 1.1283791
  %v198 = vmul.f32 %v103, %v197
  %v199 = vmul.f32 %v187, 3.8918573e-05
  %v200 = vadd.f32 %v199, 0.001143296
  %v201 = vmul.f32 %v187, %v200
  %v202 = vadd.f32 %v201, 0.014752088
  %v203 = vmul.f32 %v187, %v202
  %v204 = vadd.f32 %v203, 0.112945676
  %v205 = vmul.f32 %v187, %v204
  %v206 = vadd.f32 %v205, 0.4994258
  %v207 = vmul.f32 %v187, %v206
  %v208 = vadd.f32 %v207, 1.0
  %v209 = vrcp.pop %v208
  %v210 = vmul.f32 %v208, %v209
  %v211 = vsub.f32 1.0, %v210
  %v212 = vmul.f32 %v209, %v211
  %v213 = vadd.f32 %v209, %v212
  %vm214 = vweird.f32 %v208
  %vm215 = vweird.f32 %v209
  %vm216 = vmor %vm214, %vm215
  %v217 = vsel %vm216, %v209, %v213
  %v218 = vand.u32 2147483647, %v208
  %vm219 = vcmp.eq.f32.partialorder %v218, 8.507059e+37
  %v220 = vand.u32 %v208, 2147483648
  %v221 = vor.u32 1.1754944e-38, %v220
  %v222 = vsel %vm219, %v221, %v217
  %v223 = vmul.f32 %v198, %v222
  %v224 = vmin.f32 %v223, 1.0
  %v225 = vmax.f32 %v224, -1.0
  %v226 = vmul.f32 %v104, %v104
  %v227 = vmin.f32 16.0, %v226
  %v228 = vmul.f32 %v227, 2.1237322e-06
  %v229 = vadd.f32 %v228, 0.00028619796
  %v230 = vmul.f32 %v227, %v229
  %v231 = vadd.f32 %v230, 0.0036580483
  %v232 = vmul.f32 %v227, %v231
  %v233 = vadd.f32 %v232, 0.05243302
  %v234 = vmul.f32 %v227, %v233
  %v235 = vadd.f32 %v234, 0.18741608
  %v236 = vmul.f32 %v227, %v235
  %v237 = vadd.f32 %v236, 1.1283791
  %v238 = vmul.f32 %v104, %v237
  %v239 = vmul.f32 %v227, 3.8918573e-05
  %v240 = vadd.f32 %v239, 0.001143296
  %v241 = vmul.f32 %v227, %v240
  %v242 = vadd.f32 %v241, 0.014752088
  %v243 = vmul.f32 %v227, %v242
  %v244 = vadd.f32 %v243, 0.112945676
  %v245 = vmul.f32 %v227, %v244
  %v246 = vadd.f32 %v245, 0.4994258
  %v247 = vmul.f32 %v227, %v246
  %v248 = vadd.f32 %v247, 1.0
  %v249 = vrcp.pop %v248
  %v250 = vmul.f32 %v248, %v249
  %v251 = vsub.f32 1.0, %v250
  %v252 = vmul.f32 %v249, %v251
  %v253 = vadd.f32 %v249, %v252
  %vm254 = vweird.f32 %v248
  %vm255 = vweird.f32 %v249
  %vm256 = vmor %vm254, %vm255
  %v257 = vsel %vm256, %v249, %v253
  %v258 = vand.u32 2147483647, %v248
  %vm259 = vcmp.eq.f32.partialorder %v258, 8.507059e+37
  %v260 = vand.u32 %v248, 2147483648
  %v261 = vor.u32 1.1754944e-38, %v260
  %v262 = vsel %vm259, %v261, %v257
  %v263 = vmul.f32 %v238, %v262
  %v264 = vmin.f32 %v263, 1.0
  %v265 = vmax.f32 %v264, -1.0
  %v266 = vmul.f32 %v105, %v105
  %v267 = vmin.f32 16.0, %v266
  %v268 = vmul.f32 %v267, 2.1237322e-06
  %v269 = vadd.f32 %v268, 0.00028619796
  %v270 = vmul.f32 %v267, %v269
  %v271 = vadd.f32 %v270, 0.0036580483
  %v272 = vmul.f32 %v267, %v271
  %v273 = vadd.f32 %v272, 0.05243302
  %v274 = vmul.f32 %v267, %v273
  %v275 = vadd.f32 %v274, 0.18741608
  %v276 = vmul.f32 %v267, %v275
  %v277 = vadd.f32 %v276, 1.1283791
  %v278 = vmul.f32 %v105, %v277
  %v279 = vmul.f32 %v267, 3.8918573e-05
  %v280 = vadd.f32 %v279, 0.001143296
  %v281 = vmul.f32 %v267, %v280
  %v282 = vadd.f32 %v281, 0.014752088
  %v283 = vmul.f32 %v267, %v282
  %v284 = vadd.f32 %v283, 0.112945676
  %v285 = vmul.f32 %v267, %v284
  %v286 = vadd.f32 %v285, 0.4994258
  %v287 = vmul.f32 %v267, %v286
  %v288 = vadd.f32 %v287, 1.0
  %v289 = vrcp.pop %v288
  %v290 = vmul.f32 %v288, %v289
  %v291 = vsub.f32 1.0, %v290
  %v292 = vmul.f32 %v289, %v291
  %v293 = vadd.f32 %v289, %v292
  %vm294 = vweird.f32 %v288
  %vm295 = vweird.f32 %v289
  %vm296 = vmor %vm294, %vm295
  %v297 = vsel %vm296, %v289, %v293
  %v298 = vand.u32 2147483647, %v288
  %vm299 = vcmp.eq.f32.partialorder %v298, 8.507059e+37
  %v300 = vand.u32 %v288, 2147483648
  %v301 = vor.u32 1.1754944e-38, %v300
  %v302 = vsel %vm299, %v301, %v297
  %v303 = vmul.f32 %v278, %v302
  %v304 = vmin.f32 %v303, 1.0
  %v305 = vmax.f32 %v304, -1.0
  %v306 = vadd.f32 %v145, 1.0
  %v307 = vadd.f32 %v185, 1.0
  %v308 = vadd.f32 %v225, 1.0
  %v309 = vadd.f32 %v265, 1.0
  %v310 = vadd.f32 %v305, 1.0
  %v311 = vmul.f32 %v96, %v306
  %v312 = vmul.f32 %v97, %v307
  %v313 = vmul.f32 %v98, %v308
  %v314 = vmul.f32 %v99, %v309
  %v315 = vmul.f32 %v100, %v310
  %s316 = smul.u32 0, 128
  %v317 = vlaneseq
  %v318 = vand.u32 %v317, 127
  %v319 = vstv %s316
  %v320 = vadd.s32 %v319, %v318
  %vm321 = vcmp.lt.s32.totalorder %v320, 32
  %v322 = vsel %vm321, %v311, 0.0
  %v323 = vsel %vm321, %v312, 0.0
  %v324 = vsel %vm321, %v313, 0.0
  %v325 = vsel %vm321, %v314, 0.0
  %v326 = vsel %vm321, %v315, 0.0
  %v327 = vld [vmem:[%s3] sm:$0xff]
  %v328 = vpack.c.bf16 %v327, %v327
  %v329 = vpack.c.bf16 %v323, %v322
  %v330 = vpack.c.bf16 %v325, %v324
  %v331 = vpack.c.bf16 %v326, %v326
  %vm332 = vcmask 293888
  %v334 = vsel %vm332, %v328, 0
  %vm336 = vcmask 1041408
  %v338 = vsel %vm336, %v331, 0
  %340 = vmatpush.bf16.msra.mxu0 0
  %341 = vmatpush.bf16.msra.mxu0 0
  %342 = vmatpush.bf16.msra.mxu0 0
  %343 = vmatpush.bf16.msra.mxu0 0
  %344 = vmatpush.bf16.msra.mxu0 0
  %345 = vmatpush.bf16.msra.mxu0 %v338
  %346 = vmatpush.bf16.msra.mxu0 %v330
  %347 = vmatpush.bf16.msra.mxu0 %v329
  %348 = vmatmul.bf16.gmra.mxu0 %v334
  %v349 = vpop.f32.mrf.mxu0
  %v350 = vadd.f32 0.0, %v349
  %v351 = vpop.f32.mrf.mxu0
  %352 = vdwg.mxu0
  %353 = vst [vmem:[%s4] sm:$0xff] %v350
  %354 = vadd.xlane.f32.xlu0 %v350
  %v355 = vpop.xlane.xlu0 %354
  %v356 = vmul.f32 %v350, %v350
  %357 = vadd.xlane.f32.xlu0 %v356
  %v358 = vpop.xlane.xlu0 %357
  %p359 = scmp.eq.s32.totalorder 0, 0
  // Predicated region
  $region18: #{_lambda_.6} parent=0 // pred_check
    %p360 = pneg %p359
  $region19: #{_lambda_.6} parent=0 // pred_check_branch
    %362 = sbr.rel (%p360) target = $region21
  $region20: #{_lambda_.6} parent=0 // pred_region
    %vm363 = vcmask 7168
    %364 = vst.msk [vmem:[%s5] sm:$0xff] %vm363, %v355
    %365 = vst.msk [vmem:[%s6] sm:$0xff] %vm363, %v358
  $region21: #{_lambda_.6} parent=0 // pred_fallthru
    _
  %p366 = scmp.ne.s32.totalorder 0, 0
  // Predicated region
  $region22: #{_lambda_.6} parent=0 // pred_check
    %p367 = pneg %p366
  $region23: #{_lambda_.6} parent=0 // pred_check_branch
    %369 = sbr.rel (%p367) target = $region25
  $region24: #{_lambda_.6} parent=0 // pred_region
    %v370 = vld [vmem:[%s5] sm:$0xff]
    %v371 = vadd.f32 %v370, %v355
    %vm372 = vcmask 7168
    %373 = vst.msk [vmem:[%s5] sm:$0xff] %vm372, %v371
    %v374 = vld [vmem:[%s6] sm:$0xff]
    %v375 = vadd.f32 %v374, %v358
    %376 = vst.msk [vmem:[%s6] sm:$0xff] %vm372, %v375
  $region25: #{_lambda_.6} parent=0 // pred_fallthru
    _
  // Predicated region
  $region26: #{_lambda_.6} parent=0 // pred_check
    _
  $region27: #{_lambda_.6} parent=0 // pred_check_branch
    %378 = sbr.rel (0) target = $region29
  $region28: #{_lambda_.6} parent=0 // pred_region
    _
  $region29: #{_lambda_.6} parent=0 // pred_fallthru
    _
  // Predicated region
  $region30: #{_lambda_.6} parent=0 // pred_check
    _
  $region31: #{_lambda_.6} parent=0 // pred_check_branch
    %380 = sbr.rel (0) target = $region33
  $region32: #{_lambda_.6} parent=0 // pred_region
    _
  $region33: #{_lambda_.6} parent=0 // pred_fallthru
    _
  // Predicated region
  $region34: #{_lambda_.6} parent=0 // pred_check
    _
  $region35: #{_lambda_.6} parent=0 // pred_check_branch
    %382 = sbr.rel (0) target = $region37
  $region36: #{_lambda_.6} parent=0 // pred_region
    _
  $region37: #{_lambda_.6} parent=0 // pred_fallthru
    _
  // Predicated region
  $region38: #{_lambda_.6} parent=0 // pred_check
    _
  $region39: #{_lambda_.6} parent=0 // pred_check_branch
    %384 = sbr.rel (0) target = $region41
  $region40: #{_lambda_.6} parent=0 // pred_region
    _
  $region41: #{_lambda_.6} parent=0 // pred_fallthru
    _
  // Predicated region
  $region42: #{_lambda_.6} parent=0 // pred_check
    _
  $region43: #{_lambda_.6} parent=0 // pred_check_branch
    %386 = sbr.rel (0) target = $region45
  $region44: #{_lambda_.6} parent=0 // pred_region
    _
  $region45: #{_lambda_.6} parent=0 // pred_fallthru
    _
  // Predicated region
  $region46: #{_lambda_.6} parent=0 // pred_check
    _
  $region47: #{_lambda_.6} parent=0 // pred_check_branch
    %388 = sbr.rel (0) target = $region49
  $region48: #{_lambda_.6} parent=0 // pred_region
    _
  $region49: #{_lambda_.6} parent=0 // pred_fallthru
    _

// kernel: _lambda_.9
$region0: #{_lambda_.9}
  #allocation0 [shape = 'u32[]', space=smem, size = 0x4, offset = 0x4, fixed_abs, tag = 'smem constant byte address 0x4 - core index']
  #allocation1 [shape = 'u32[72,128]{1,0:T(1,128)}', space=vmem, size = 0x9000, scoped, tag = 'internal scratch']
  %s0 = inlined_call_operand.vmem [shape: f32[32,128], index: 0, kind: input, shape index: {}]
  %s1 = inlined_call_operand.vmem [shape: f32[32,1], index: 1, kind: input, shape index: {}]
  %s2 = inlined_call_operand.vmem [shape: f32[32,1], index: 2, kind: input, shape index: {}]
  %s3 = inlined_call_operand.vmem [shape: f32[32,128], index: 3, kind: output, shape index: {}]
  %s4 = sld [smem:[#allocation0]]
  $region22: #{_lambda_.9} parent=0
    _
  %s6 = ssub.s32 1, %s4
  %s7 = scalar_select 0, %s6, %s4
  // Predicated region
  $region2: #{_lambda_.9} parent=0 // pred_check
    _
  $region3: #{_lambda_.9} parent=0 // pred_check_branch
    %9 = sbr.rel (0) target = $region5
  $region4: #{_lambda_.9} parent=0 // pred_region
    _
  $region5: #{_lambda_.9} parent=0 // pred_fallthru
    _
  // Predicated region
  $region6: #{_lambda_.9} parent=0 // pred_check
    _
  $region7: #{_lambda_.9} parent=0 // pred_check_branch
    %11 = sbr.rel (0) target = $region9
  $region8: #{_lambda_.9} parent=0 // pred_region
    _
  $region9: #{_lambda_.9} parent=0 // pred_fallthru
    _
  // Predicated region
  $region10: #{_lambda_.9} parent=0 // pred_check
    _
  $region11: #{_lambda_.9} parent=0 // pred_check_branch
    %13 = sbr.rel (0) target = $region13
  $region12: #{_lambda_.9} parent=0 // pred_region
    _
  $region13: #{_lambda_.9} parent=0 // pred_fallthru
    _
  %v14 = vld [vmem:[%s0] sm:$0xff]
  %v15 = vld [vmem:[%s0 + $0x8] sm:$0xff]
  %v16 = vld [vmem:[%s0 + $0x10] sm:$0xff]
  %v17 = vld [vmem:[%s0 + $0x18] sm:$0xff]
  %v18 = vld [vmem:[%s1] sm:$0xff]
  %v19 = vld [vmem:[%s1 + $0x8] sm:$0xff]
  %v20 = vld [vmem:[%s1 + $0x10] sm:$0xff]
  %v21 = vld [vmem:[%s1 + $0x18] sm:$0xff]
  %23 = vset.pattern.permute.xlu0 0
  %24 = vperm.xlu0 %23, %v18
  %v25 = vpop.permute.xlu0 %24
  %28 = vset.pattern.permute.xlu0 0
  %29 = vperm.xlu0 %28, %v19
  %v30 = vpop.permute.xlu0 %29
  %33 = vset.pattern.permute.xlu0 0
  %34 = vperm.xlu0 %33, %v20
  %v35 = vpop.permute.xlu0 %34
  %38 = vset.pattern.permute.xlu0 0
  %39 = vperm.xlu0 %38, %v21
  %v40 = vpop.permute.xlu0 %39
  %v42 = vmul.f32 %v14, %v25
  %v43 = vmul.f32 %v15, %v30
  %v44 = vmul.f32 %v16, %v35
  %v45 = vmul.f32 %v17, %v40
  %v46 = vld [vmem:[%s2] sm:$0xff]
  %v47 = vld [vmem:[%s2 + $0x8] sm:$0xff]
  %v48 = vld [vmem:[%s2 + $0x10] sm:$0xff]
  %v49 = vld [vmem:[%s2 + $0x18] sm:$0xff]
  %51 = vset.pattern.permute.xlu0 0
  %52 = vperm.xlu0 %51, %v46
  %v53 = vpop.permute.xlu0 %52
  %56 = vset.pattern.permute.xlu0 0
  %57 = vperm.xlu0 %56, %v47
  %v58 = vpop.permute.xlu0 %57
  %61 = vset.pattern.permute.xlu0 0
  %62 = vperm.xlu0 %61, %v48
  %v63 = vpop.permute.xlu0 %62
  %66 = vset.pattern.permute.xlu0 0
  %67 = vperm.xlu0 %66, %v49
  %v68 = vpop.permute.xlu0 %67
  %v70 = vadd.f32 %v42, %v53
  %v71 = vadd.f32 %v43, %v58
  %v72 = vadd.f32 %v44, %v63
  %v73 = vadd.f32 %v45, %v68
  %v74 = vmul.f32 %v70, 0.5
  %v75 = vmul.f32 %v71, 0.5
  %v76 = vmul.f32 %v72, 0.5
  %v77 = vmul.f32 %v73, 0.5
  %v78 = vmul.f32 %v70, 0.70710677
  %v79 = vmul.f32 %v71, 0.70710677
  %v80 = vmul.f32 %v72, 0.70710677
  %v81 = vmul.f32 %v73, 0.70710677
  %v82 = vmul.f32 %v78, %v78
  %v83 = vmin.f32 16.0, %v82
  %v84 = vmul.f32 %v83, 2.1237322e-06
  %v85 = vadd.f32 %v84, 0.00028619796
  %v86 = vmul.f32 %v83, %v85
  %v87 = vadd.f32 %v86, 0.0036580483
  %v88 = vmul.f32 %v83, %v87
  %v89 = vadd.f32 %v88, 0.05243302
  %v90 = vmul.f32 %v83, %v89
  %v91 = vadd.f32 %v90, 0.18741608
  %v92 = vmul.f32 %v83, %v91
  %v93 = vadd.f32 %v92, 1.1283791
  %v94 = vmul.f32 %v78, %v93
  %v95 = vmul.f32 %v83, 3.8918573e-05
  %v96 = vadd.f32 %v95, 0.001143296
  %v97 = vmul.f32 %v83, %v96
  %v98 = vadd.f32 %v97, 0.014752088
  %v99 = vmul.f32 %v83, %v98
  %v100 = vadd.f32 %v99, 0.112945676
  %v101 = vmul.f32 %v83, %v100
  %v102 = vadd.f32 %v101, 0.4994258
  %v103 = vmul.f32 %v83, %v102
  %v104 = vadd.f32 %v103, 1.0
  %v105 = vrcp.pop %v104
  %v106 = vmul.f32 %v104, %v105
  %v107 = vsub.f32 1.0, %v106
  %v108 = vmul.f32 %v105, %v107
  %v109 = vadd.f32 %v105, %v108
  %vm110 = vweird.f32 %v104
  %vm111 = vweird.f32 %v105
  %vm112 = vmor %vm110, %vm111
  %v113 = vsel %vm112, %v105, %v109
  %v114 = vand.u32 2147483647, %v104
  %vm115 = vcmp.eq.f32.partialorder %v114, 8.507059e+37
  %v116 = vand.u32 %v104, 2147483648
  %v117 = vor.u32 1.1754944e-38, %v116
  %v118 = vsel %vm115, %v117, %v113
  %v119 = vmul.f32 %v94, %v118
  %v120 = vmin.f32 %v119, 1.0
  %v121 = vmax.f32 %v120, -1.0
  %v122 = vmul.f32 %v79, %v79
  %v123 = vmin.f32 16.0, %v122
  %v124 = vmul.f32 %v123, 2.1237322e-06
  %v125 = vadd.f32 %v124, 0.00028619796
  %v126 = vmul.f32 %v123, %v125
  %v127 = vadd.f32 %v126, 0.0036580483
  %v128 = vmul.f32 %v123, %v127
  %v129 = vadd.f32 %v128, 0.05243302
  %v130 = vmul.f32 %v123, %v129
  %v131 = vadd.f32 %v130, 0.18741608
  %v132 = vmul.f32 %v123, %v131
  %v133 = vadd.f32 %v132, 1.1283791
  %v134 = vmul.f32 %v79, %v133
  %v135 = vmul.f32 %v123, 3.8918573e-05
  %v136 = vadd.f32 %v135, 0.001143296
  %v137 = vmul.f32 %v123, %v136
  %v138 = vadd.f32 %v137, 0.014752088
  %v139 = vmul.f32 %v123, %v138
  %v140 = vadd.f32 %v139, 0.112945676
  %v141 = vmul.f32 %v123, %v140
  %v142 = vadd.f32 %v141, 0.4994258
  %v143 = vmul.f32 %v123, %v142
  %v144 = vadd.f32 %v143, 1.0
  %v145 = vrcp.pop %v144
  %v146 = vmul.f32 %v144, %v145
  %v147 = vsub.f32 1.0, %v146
  %v148 = vmul.f32 %v145, %v147
  %v149 = vadd.f32 %v145, %v148
  %vm150 = vweird.f32 %v144
  %vm151 = vweird.f32 %v145
  %vm152 = vmor %vm150, %vm151
  %v153 = vsel %vm152, %v145, %v149
  %v154 = vand.u32 2147483647, %v144
  %vm155 = vcmp.eq.f32.partialorder %v154, 8.507059e+37
  %v156 = vand.u32 %v144, 2147483648
  %v157 = vor.u32 1.1754944e-38, %v156
  %v158 = vsel %vm155, %v157, %v153
  %v159 = vmul.f32 %v134, %v158
  %v160 = vmin.f32 %v159, 1.0
  %v161 = vmax.f32 %v160, -1.0
  %v162 = vmul.f32 %v80, %v80
  %v163 = vmin.f32 16.0, %v162
  %v164 = vmul.f32 %v163, 2.1237322e-06
  %v165 = vadd.f32 %v164, 0.00028619796
  %v166 = vmul.f32 %v163, %v165
  %v167 = vadd.f32 %v166, 0.0036580483
  %v168 = vmul.f32 %v163, %v167
  %v169 = vadd.f32 %v168, 0.05243302
  %v170 = vmul.f32 %v163, %v169
  %v171 = vadd.f32 %v170, 0.18741608
  %v172 = vmul.f32 %v163, %v171
  %v173 = vadd.f32 %v172, 1.1283791
  %v174 = vmul.f32 %v80, %v173
  %v175 = vmul.f32 %v163, 3.8918573e-05
  %v176 = vadd.f32 %v175, 0.001143296
  %v177 = vmul.f32 %v163, %v176
  %v178 = vadd.f32 %v177, 0.014752088
  %v179 = vmul.f32 %v163, %v178
  %v180 = vadd.f32 %v179, 0.112945676
  %v181 = vmul.f32 %v163, %v180
  %v182 = vadd.f32 %v181, 0.4994258
  %v183 = vmul.f32 %v163, %v182
  %v184 = vadd.f32 %v183, 1.0
  %v185 = vrcp.pop %v184
  %v186 = vmul.f32 %v184, %v185
  %v187 = vsub.f32 1.0, %v186
  %v188 = vmul.f32 %v185, %v187
  %v189 = vadd.f32 %v185, %v188
  %vm190 = vweird.f32 %v184
  %vm191 = vweird.f32 %v185
  %vm192 = vmor %vm190, %vm191
  %v193 = vsel %vm192, %v185, %v189
  %v194 = vand.u32 2147483647, %v184
  %vm195 = vcmp.eq.f32.partialorder %v194, 8.507059e+37
  %v196 = vand.u32 %v184, 2147483648
  %v197 = vor.u32 1.1754944e-38, %v196
  %v198 = vsel %vm195, %v197, %v193
  %v199 = vmul.f32 %v174, %v198
  %v200 = vmin.f32 %v199, 1.0
  %v201 = vmax.f32 %v200, -1.0
  %v202 = vmul.f32 %v81, %v81
  %v203 = vmin.f32 16.0, %v202
  %v204 = vmul.f32 %v203, 2.1237322e-06
  %v205 = vadd.f32 %v204, 0.00028619796
  %v206 = vmul.f32 %v203, %v205
  %v207 = vadd.f32 %v206, 0.0036580483
  %v208 = vmul.f32 %v203, %v207
  %v209 = vadd.f32 %v208, 0.05243302
  %v210 = vmul.f32 %v203, %v209
  %v211 = vadd.f32 %v210, 0.18741608
  %v212 = vmul.f32 %v203, %v211
  %v213 = vadd.f32 %v212, 1.1283791
  %v214 = vmul.f32 %v81, %v213
  %v215 = vmul.f32 %v203, 3.8918573e-05
  %v216 = vadd.f32 %v215, 0.001143296
  %v217 = vmul.f32 %v203, %v216
  %v218 = vadd.f32 %v217, 0.014752088
  %v219 = vmul.f32 %v203, %v218
  %v220 = vadd.f32 %v219, 0.112945676
  %v221 = vmul.f32 %v203, %v220
  %v222 = vadd.f32 %v221, 0.4994258
  %v223 = vmul.f32 %v203, %v222
  %v224 = vadd.f32 %v223, 1.0
  %v225 = vrcp.pop %v224
  %v226 = vmul.f32 %v224, %v225
  %v227 = vsub.f32 1.0, %v226
  %v228 = vmul.f32 %v225, %v227
  %v229 = vadd.f32 %v225, %v228
  %vm230 = vweird.f32 %v224
  %vm231 = vweird.f32 %v225
  %vm232 = vmor %vm230, %vm231
  %v233 = vsel %vm232, %v225, %v229
  %v234 = vand.u32 2147483647, %v224
  %vm235 = vcmp.eq.f32.partialorder %v234, 8.507059e+37
  %v236 = vand.u32 %v224, 2147483648
  %v237 = vor.u32 1.1754944e-38, %v236
  %v238 = vsel %vm235, %v237, %v233
  %v239 = vmul.f32 %v214, %v238
  %v240 = vmin.f32 %v239, 1.0
  %v241 = vmax.f32 %v240, -1.0
  %v242 = vadd.f32 %v121, 1.0
  %v243 = vadd.f32 %v161, 1.0
  %v244 = vadd.f32 %v201, 1.0
  %v245 = vadd.f32 %v241, 1.0
  %v246 = vmul.f32 %v74, %v242
  %v247 = vmul.f32 %v75, %v243
  %v248 = vmul.f32 %v76, %v244
  %v249 = vmul.f32 %v77, %v245
  %250 = vst [vmem:[%s3] sm:$0xff] %v246
  %251 = vst [vmem:[%s3 + $0x8] sm:$0xff] %v247
  %252 = vst [vmem:[%s3 + $0x10] sm:$0xff] %v248
  %253 = vst [vmem:[%s3 + $0x18] sm:$0xff] %v249
  // Predicated region
  $region14: #{_lambda_.9} parent=0 // pred_check
    _
  $region15: #{_lambda_.9} parent=0 // pred_check_branch
    %255 = sbr.rel (0) target = $region17
  $region16: #{_lambda_.9} parent=0 // pred_region
    _
  $region17: #{_lambda_.9} parent=0 // pred_fallthru
    _
  // Predicated region
  $region18: #{_lambda_.9} parent=0 // pred_check
    _
  $region19: #{_lambda_.9} parent=0 // pred_check_branch
    %257 = sbr.rel (0) target = $region21
  $region20: #{_lambda_.9} parent=0 // pred_region
    _
  $region21: #{_lambda_.9} parent=0 // pred_fallthru
    _

// kernel: _lambda_.7
$region0: #{_lambda_.7}
  #allocation0 [shape = 'u32[]', space=smem, size = 0x4, offset = 0x4, fixed_abs, tag = 'smem constant byte address 0x4 - core index']
  #allocation1 [shape = 'u32[72,128]{1,0:T(1,128)}', space=vmem, size = 0x9000, scoped, tag = 'internal scratch']
  %s0 = inlined_call_operand.vmem [shape: f32[72,128], index: 0, kind: input, shape index: {}]
  %s1 = inlined_call_operand.vmem [shape: f32[72,1], index: 1, kind: input, shape index: {}]
  %s2 = inlined_call_operand.vmem [shape: f32[72,1], index: 2, kind: input, shape index: {}]
  %s3 = inlined_call_operand.vmem [shape: f32[16,72], index: 3, kind: input, shape index: {}]
  %s4 = inlined_call_operand.vmem [shape: f32[16,128], index: 4, kind: output, shape index: {0}]
  %s5 = inlined_call_operand.vmem [shape: f32[16,1], index: 5, kind: output, shape index: {1}]
  %s6 = inlined_call_operand.vmem [shape: f32[16,1], index: 6, kind: output, shape index: {2}]
  %7 = xla_tuple %s4, %s5, %s6
  %s8 = sld [smem:[#allocation0]]
  $region50: #{_lambda_.7} parent=0
    _
  %s10 = ssub.s32 1, %s8
  %s11 = scalar_select 0, %s10, %s8
  // Predicated region
  $region2: #{_lambda_.7} parent=0 // pred_check
    _
  $region3: #{_lambda_.7} parent=0 // pred_check_branch
    %13 = sbr.rel (0) target = $region5
  $region4: #{_lambda_.7} parent=0 // pred_region
    _
  $region5: #{_lambda_.7} parent=0 // pred_fallthru
    _
  // Predicated region
  $region6: #{_lambda_.7} parent=0 // pred_check
    _
  $region7: #{_lambda_.7} parent=0 // pred_check_branch
    %15 = sbr.rel (0) target = $region9
  $region8: #{_lambda_.7} parent=0 // pred_region
    _
  $region9: #{_lambda_.7} parent=0 // pred_fallthru
    _
  // Predicated region
  $region10: #{_lambda_.7} parent=0 // pred_check
    _
  $region11: #{_lambda_.7} parent=0 // pred_check_branch
    %17 = sbr.rel (0) target = $region13
  $region12: #{_lambda_.7} parent=0 // pred_region
    _
  $region13: #{_lambda_.7} parent=0 // pred_fallthru
    _
  // Predicated region
  $region14: #{_lambda_.7} parent=0 // pred_check
    _
  $region15: #{_lambda_.7} parent=0 // pred_check_branch
    %19 = sbr.rel (0) target = $region17
  $region16: #{_lambda_.7} parent=0 // pred_region
    _
  $region17: #{_lambda_.7} parent=0 // pred_fallthru
    _
  %v21 = vld [vmem:[%s0] sm:$0xff]
  %v22 = vld [vmem:[%s0 + $0x8] sm:$0xff]
  %v23 = vld [vmem:[%s0 + $0x10] sm:$0xff]
  %v24 = vld [vmem:[%s0 + $0x18] sm:$0xff]
  %v25 = vld [vmem:[%s0 + $0x20] sm:$0xff]
  %v26 = vld [vmem:[%s0 + $0x28] sm:$0xff]
  %v27 = vld [vmem:[%s0 + $0x30] sm:$0xff]
  %v28 = vld [vmem:[%s0 + $0x38] sm:$0xff]
  %v29 = vld [vmem:[%s0 + $0x40] sm:$0xff]
  %v30 = vld [vmem:[%s1] sm:$0xff]
  %v31 = vld [vmem:[%s1 + $0x8] sm:$0xff]
  %v32 = vld [vmem:[%s1 + $0x10] sm:$0xff]
  %v33 = vld [vmem:[%s1 + $0x18] sm:$0xff]
  %v34 = vld [vmem:[%s1 + $0x20] sm:$0xff]
  %v35 = vld [vmem:[%s1 + $0x28] sm:$0xff]
  %v36 = vld [vmem:[%s1 + $0x30] sm:$0xff]
  %v37 = vld [vmem:[%s1 + $0x38] sm:$0xff]
  %v38 = vld [vmem:[%s1 + $0x40] sm:$0xff]
  %40 = vset.pattern.permute.xlu0 0
  %41 = vperm.xlu0 %40, %v30
  %v42 = vpop.permute.xlu0 %41
  %45 = vset.pattern.permute.xlu0 0
  %46 = vperm.xlu0 %45, %v31
  %v47 = vpop.permute.xlu0 %46
  %50 = vset.pattern.permute.xlu0 0
  %51 = vperm.xlu0 %50, %v32
  %v52 = vpop.permute.xlu0 %51
  %55 = vset.pattern.permute.xlu0 0
  %56 = vperm.xlu0 %55, %v33
  %v57 = vpop.permute.xlu0 %56
  %60 = vset.pattern.permute.xlu0 0
  %61 = vperm.xlu0 %60, %v34
  %v62 = vpop.permute.xlu0 %61
  %65 = vset.pattern.permute.xlu0 0
  %66 = vperm.xlu0 %65, %v35
  %v67 = vpop.permute.xlu0 %66
  %70 = vset.pattern.permute.xlu0 0
  %71 = vperm.xlu0 %70, %v36
  %v72 = vpop.permute.xlu0 %71
  %75 = vset.pattern.permute.xlu0 0
  %76 = vperm.xlu0 %75, %v37
  %v77 = vpop.permute.xlu0 %76
  %80 = vset.pattern.permute.xlu0 0
  %81 = vperm.xlu0 %80, %v38
  %v82 = vpop.permute.xlu0 %81
  %v84 = vmul.f32 %v21, %v42
  %v85 = vmul.f32 %v22, %v47
  %v86 = vmul.f32 %v23, %v52
  %v87 = vmul.f32 %v24, %v57
  %v88 = vmul.f32 %v25, %v62
  %v89 = vmul.f32 %v26, %v67
  %v90 = vmul.f32 %v27, %v72
  %v91 = vmul.f32 %v28, %v77
  %v92 = vmul.f32 %v29, %v82
  %v93 = vld [vmem:[%s2] sm:$0xff]
  %v94 = vld [vmem:[%s2 + $0x8] sm:$0xff]
  %v95 = vld [vmem:[%s2 + $0x10] sm:$0xff]
  %v96 = vld [vmem:[%s2 + $0x18] sm:$0xff]
  %v97 = vld [vmem:[%s2 + $0x20] sm:$0xff]
  %v98 = vld [vmem:[%s2 + $0x28] sm:$0xff]
  %v99 = vld [vmem:[%s2 + $0x30] sm:$0xff]
  %v100 = vld [vmem:[%s2 + $0x38] sm:$0xff]
  %v101 = vld [vmem:[%s2 + $0x40] sm:$0xff]
  %103 = vset.pattern.permute.xlu0 0
  %104 = vperm.xlu0 %103, %v93
  %v105 = vpop.permute.xlu0 %104
  %108 = vset.pattern.permute.xlu0 0
  %109 = vperm.xlu0 %108, %v94
  %v110 = vpop.permute.xlu0 %109
  %113 = vset.pattern.permute.xlu0 0
  %114 = vperm.xlu0 %113, %v95
  %v115 = vpop.permute.xlu0 %114
  %118 = vset.pattern.permute.xlu0 0
  %119 = vperm.xlu0 %118, %v96
  %v120 = vpop.permute.xlu0 %119
  %123 = vset.pattern.permute.xlu0 0
  %124 = vperm.xlu0 %123, %v97
  %v125 = vpop.permute.xlu0 %124
  %128 = vset.pattern.permute.xlu0 0
  %129 = vperm.xlu0 %128, %v98
  %v130 = vpop.permute.xlu0 %129
  %133 = vset.pattern.permute.xlu0 0
  %134 = vperm.xlu0 %133, %v99
  %v135 = vpop.permute.xlu0 %134
  %138 = vset.pattern.permute.xlu0 0
  %139 = vperm.xlu0 %138, %v100
  %v140 = vpop.permute.xlu0 %139
  %143 = vset.pattern.permute.xlu0 0
  %144 = vperm.xlu0 %143, %v101
  %v145 = vpop.permute.xlu0 %144
  %v147 = vadd.f32 %v84, %v105
  %v148 = vadd.f32 %v85, %v110
  %v149 = vadd.f32 %v86, %v115
  %v150 = vadd.f32 %v87, %v120
  %v151 = vadd.f32 %v88, %v125
  %v152 = vadd.f32 %v89, %v130
  %v153 = vadd.f32 %v90, %v135
  %v154 = vadd.f32 %v91, %v140
  %v155 = vadd.f32 %v92, %v145
  %v156 = vmul.f32 %v147, 0.5
  %v157 = vmul.f32 %v148, 0.5
  %v158 = vmul.f32 %v149, 0.5
  %v159 = vmul.f32 %v150, 0.5
  %v160 = vmul.f32 %v151, 0.5
  %v161 = vmul.f32 %v152, 0.5
  %v162 = vmul.f32 %v153, 0.5
  %v163 = vmul.f32 %v154, 0.5
  %v164 = vmul.f32 %v155, 0.5
  %v165 = vmul.f32 %v147, 0.70710677
  %v166 = vmul.f32 %v148, 0.70710677
  %v167 = vmul.f32 %v149, 0.70710677
  %v168 = vmul.f32 %v150, 0.70710677
  %v169 = vmul.f32 %v151, 0.70710677
  %v170 = vmul.f32 %v152, 0.70710677
  %v171 = vmul.f32 %v153, 0.70710677
  %v172 = vmul.f32 %v154, 0.70710677
  %v173 = vmul.f32 %v155, 0.70710677
  %v174 = vmul.f32 %v165, %v165
  %v175 = vmin.f32 16.0, %v174
  %v176 = vmul.f32 %v175, 2.1237322e-06
  %v177 = vadd.f32 %v176, 0.00028619796
  %v178 = vmul.f32 %v175, %v177
  %v179 = vadd.f32 %v178, 0.0036580483
  %v180 = vmul.f32 %v175, %v179
  %v181 = vadd.f32 %v180, 0.05243302
  %v182 = vmul.f32 %v175, %v181
  %v183 = vadd.f32 %v182, 0.18741608
  %v184 = vmul.f32 %v175, %v183
  %v185 = vadd.f32 %v184, 1.1283791
  %v186 = vmul.f32 %v165, %v185
  %v187 = vmul.f32 %v175, 3.8918573e-05
  %v188 = vadd.f32 %v187, 0.001143296
  %v189 = vmul.f32 %v175, %v188
  %v190 = vadd.f32 %v189, 0.014752088
  %v191 = vmul.f32 %v175, %v190
  %v192 = vadd.f32 %v191, 0.112945676
  %v193 = vmul.f32 %v175, %v192
  %v194 = vadd.f32 %v193, 0.4994258
  %v195 = vmul.f32 %v175, %v194
  %v196 = vadd.f32 %v195, 1.0
  %v197 = vrcp.pop %v196
  %v198 = vmul.f32 %v196, %v197
  %v199 = vsub.f32 1.0, %v198
  %v200 = vmul.f32 %v197, %v199
  %v201 = vadd.f32 %v197, %v200
  %vm202 = vweird.f32 %v196
  %vm203 = vweird.f32 %v197
  %vm204 = vmor %vm202, %vm203
  %v205 = vsel %vm204, %v197, %v201
  %v206 = vand.u32 2147483647, %v196
  %vm207 = vcmp.eq.f32.partialorder %v206, 8.507059e+37
  %v208 = vand.u32 %v196, 2147483648
  %v209 = vor.u32 1.1754944e-38, %v208
  %v210 = vsel %vm207, %v209, %v205
  %v211 = vmul.f32 %v186, %v210
  %v212 = vmin.f32 %v211, 1.0
  %v213 = vmax.f32 %v212, -1.0
  %v214 = vmul.f32 %v166, %v166
  %v215 = vmin.f32 16.0, %v214
  %v216 = vmul.f32 %v215, 2.1237322e-06
  %v217 = vadd.f32 %v216, 0.00028619796
  %v218 = vmul.f32 %v215, %v217
  %v219 = vadd.f32 %v218, 0.0036580483
  %v220 = vmul.f32 %v215, %v219
  %v221 = vadd.f32 %v220, 0.05243302
  %v222 = vmul.f32 %v215, %v221
  %v223 = vadd.f32 %v222, 0.18741608
  %v224 = vmul.f32 %v215, %v223
  %v225 = vadd.f32 %v224, 1.1283791
  %v226 = vmul.f32 %v166, %v225
  %v227 = vmul.f32 %v215, 3.8918573e-05
  %v228 = vadd.f32 %v227, 0.001143296
  %v229 = vmul.f32 %v215, %v228
  %v230 = vadd.f32 %v229, 0.014752088
  %v231 = vmul.f32 %v215, %v230
  %v232 = vadd.f32 %v231, 0.112945676
  %v233 = vmul.f32 %v215, %v232
  %v234 = vadd.f32 %v233, 0.4994258
  %v235 = vmul.f32 %v215, %v234
  %v236 = vadd.f32 %v235, 1.0
  %v237 = vrcp.pop %v236
  %v238 = vmul.f32 %v236, %v237
  %v239 = vsub.f32 1.0, %v238
  %v240 = vmul.f32 %v237, %v239
  %v241 = vadd.f32 %v237, %v240
  %vm242 = vweird.f32 %v236
  %vm243 = vweird.f32 %v237
  %vm244 = vmor %vm242, %vm243
  %v245 = vsel %vm244, %v237, %v241
  %v246 = vand.u32 2147483647, %v236
  %vm247 = vcmp.eq.f32.partialorder %v246, 8.507059e+37
  %v248 = vand.u32 %v236, 2147483648
  %v249 = vor.u32 1.1754944e-38, %v248
  %v250 = vsel %vm247, %v249, %v245
  %v251 = vmul.f32 %v226, %v250
  %v252 = vmin.f32 %v251, 1.0
  %v253 = vmax.f32 %v252, -1.0
  %v254 = vmul.f32 %v167, %v167
  %v255 = vmin.f32 16.0, %v254
  %v256 = vmul.f32 %v255, 2.1237322e-06
  %v257 = vadd.f32 %v256, 0.00028619796
  %v258 = vmul.f32 %v255, %v257
  %v259 = vadd.f32 %v258, 0.0036580483
  %v260 = vmul.f32 %v255, %v259
  %v261 = vadd.f32 %v260, 0.05243302
  %v262 = vmul.f32 %v255, %v261
  %v263 = vadd.f32 %v262, 0.18741608
  %v264 = vmul.f32 %v255, %v263
  %v265 = vadd.f32 %v264, 1.1283791
  %v266 = vmul.f32 %v167, %v265
  %v267 = vmul.f32 %v255, 3.8918573e-05
  %v268 = vadd.f32 %v267, 0.001143296
  %v269 = vmul.f32 %v255, %v268
  %v270 = vadd.f32 %v269, 0.014752088
  %v271 = vmul.f32 %v255, %v270
  %v272 = vadd.f32 %v271, 0.112945676
  %v273 = vmul.f32 %v255, %v272
  %v274 = vadd.f32 %v273, 0.4994258
  %v275 = vmul.f32 %v255, %v274
  %v276 = vadd.f32 %v275, 1.0
  %v277 = vrcp.pop %v276
  %v278 = vmul.f32 %v276, %v277
  %v279 = vsub.f32 1.0, %v278
  %v280 = vmul.f32 %v277, %v279
  %v281 = vadd.f32 %v277, %v280
  %vm282 = vweird.f32 %v276
  %vm283 = vweird.f32 %v277
  %vm284 = vmor %vm282, %vm283
  %v285 = vsel %vm284, %v277, %v281
  %v286 = vand.u32 2147483647, %v276
  %vm287 = vcmp.eq.f32.partialorder %v286, 8.507059e+37
  %v288 = vand.u32 %v276, 2147483648
  %v289 = vor.u32 1.1754944e-38, %v288
  %v290 = vsel %vm287, %v289, %v285
  %v291 = vmul.f32 %v266, %v290
  %v292 = vmin.f32 %v291, 1.0
  %v293 = vmax.f32 %v292, -1.0
  %v294 = vmul.f32 %v168, %v168
  %v295 = vmin.f32 16.0, %v294
  %v296 = vmul.f32 %v295, 2.1237322e-06
  %v297 = vadd.f32 %v296, 0.00028619796
  %v298 = vmul.f32 %v295, %v297
  %v299 = vadd.f32 %v298, 0.0036580483
  %v300 = vmul.f32 %v295, %v299
  %v301 = vadd.f32 %v300, 0.05243302
  %v302 = vmul.f32 %v295, %v301
  %v303 = vadd.f32 %v302, 0.18741608
  %v304 = vmul.f32 %v295, %v303
  %v305 = vadd.f32 %v304, 1.1283791
  %v306 = vmul.f32 %v168, %v305
  %v307 = vmul.f32 %v295, 3.8918573e-05
  %v308 = vadd.f32 %v307, 0.001143296
  %v309 = vmul.f32 %v295, %v308
  %v310 = vadd.f32 %v309, 0.014752088
  %v311 = vmul.f32 %v295, %v310
  %v312 = vadd.f32 %v311, 0.112945676
  %v313 = vmul.f32 %v295, %v312
  %v314 = vadd.f32 %v313, 0.4994258
  %v315 = vmul.f32 %v295, %v314
  %v316 = vadd.f32 %v315, 1.0
  %v317 = vrcp.pop %v316
  %v318 = vmul.f32 %v316, %v317
  %v319 = vsub.f32 1.0, %v318
  %v320 = vmul.f32 %v317, %v319
  %v321 = vadd.f32 %v317, %v320
  %vm322 = vweird.f32 %v316
  %vm323 = vweird.f32 %v317
  %vm324 = vmor %vm322, %vm323
  %v325 = vsel %vm324, %v317, %v321
  %v326 = vand.u32 2147483647, %v316
  %vm327 = vcmp.eq.f32.partialorder %v326, 8.507059e+37
  %v328 = vand.u32 %v316, 2147483648
  %v329 = vor.u32 1.1754944e-38, %v328
  %v330 = vsel %vm327, %v329, %v325
  %v331 = vmul.f32 %v306, %v330
  %v332 = vmin.f32 %v331, 1.0
  %v333 = vmax.f32 %v332, -1.0
  %v334 = vmul.f32 %v169, %v169
  %v335 = vmin.f32 16.0, %v334
  %v336 = vmul.f32 %v335, 2.1237322e-06
  %v337 = vadd.f32 %v336, 0.00028619796
  %v338 = vmul.f32 %v335, %v337
  %v339 = vadd.f32 %v338, 0.0036580483
  %v340 = vmul.f32 %v335, %v339
  %v341 = vadd.f32 %v340, 0.05243302
  %v342 = vmul.f32 %v335, %v341
  %v343 = vadd.f32 %v342, 0.18741608
  %v344 = vmul.f32 %v335, %v343
  %v345 = vadd.f32 %v344, 1.1283791
  %v346 = vmul.f32 %v169, %v345
  %v347 = vmul.f32 %v335, 3.8918573e-05
  %v348 = vadd.f32 %v347, 0.001143296
  %v349 = vmul.f32 %v335, %v348
  %v350 = vadd.f32 %v349, 0.014752088
  %v351 = vmul.f32 %v335, %v350
  %v352 = vadd.f32 %v351, 0.112945676
  %v353 = vmul.f32 %v335, %v352
  %v354 = vadd.f32 %v353, 0.4994258
  %v355 = vmul.f32 %v335, %v354
  %v356 = vadd.f32 %v355, 1.0
  %v357 = vrcp.pop %v356
  %v358 = vmul.f32 %v356, %v357
  %v359 = vsub.f32 1.0, %v358
  %v360 = vmul.f32 %v357, %v359
  %v361 = vadd.f32 %v357, %v360
  %vm362 = vweird.f32 %v356
  %vm363 = vweird.f32 %v357
  %vm364 = vmor %vm362, %vm363
  %v365 = vsel %vm364, %v357, %v361
  %v366 = vand.u32 2147483647, %v356
  %vm367 = vcmp.eq.f32.partialorder %v366, 8.507059e+37
  %v368 = vand.u32 %v356, 2147483648
  %v369 = vor.u32 1.1754944e-38, %v368
  %v370 = vsel %vm367, %v369, %v365
  %v371 = vmul.f32 %v346, %v370
  %v372 = vmin.f32 %v371, 1.0
  %v373 = vmax.f32 %v372, -1.0
  %v374 = vmul.f32 %v170, %v170
  %v375 = vmin.f32 16.0, %v374
  %v376 = vmul.f32 %v375, 2.1237322e-06
  %v377 = vadd.f32 %v376, 0.00028619796
  %v378 = vmul.f32 %v375, %v377
  %v379 = vadd.f32 %v378, 0.0036580483
  %v380 = vmul.f32 %v375, %v379
  %v381 = vadd.f32 %v380, 0.05243302
  %v382 = vmul.f32 %v375, %v381
  %v383 = vadd.f32 %v382, 0.18741608
  %v384 = vmul.f32 %v375, %v383
  %v385 = vadd.f32 %v384, 1.1283791
  %v386 = vmul.f32 %v170, %v385
  %v387 = vmul.f32 %v375, 3.8918573e-05
  %v388 = vadd.f32 %v387, 0.001143296
  %v389 = vmul.f32 %v375, %v388
  %v390 = vadd.f32 %v389, 0.014752088
  %v391 = vmul.f32 %v375, %v390
  %v392 = vadd.f32 %v391, 0.112945676
  %v393 = vmul.f32 %v375, %v392
  %v394 = vadd.f32 %v393, 0.4994258
  %v395 = vmul.f32 %v375, %v394
  %v396 = vadd.f32 %v395, 1.0
  %v397 = vrcp.pop %v396
  %v398 = vmul.f32 %v396, %v397
  %v399 = vsub.f32 1.0, %v398
  %v400 = vmul.f32 %v397, %v399
  %v401 = vadd.f32 %v397, %v400
  %vm402 = vweird.f32 %v396
  %vm403 = vweird.f32 %v397
  %vm404 = vmor %vm402, %vm403
  %v405 = vsel %vm404, %v397, %v401
  %v406 = vand.u32 2147483647, %v396
  %vm407 = vcmp.eq.f32.partialorder %v406, 8.507059e+37
  %v408 = vand.u32 %v396, 2147483648
  %v409 = vor.u32 1.1754944e-38, %v408
  %v410 = vsel %vm407, %v409, %v405
  %v411 = vmul.f32 %v386, %v410
  %v412 = vmin.f32 %v411, 1.0
  %v413 = vmax.f32 %v412, -1.0
  %v414 = vmul.f32 %v171, %v171
  %v415 = vmin.f32 16.0, %v414
  %v416 = vmul.f32 %v415, 2.1237322e-06
  %v417 = vadd.f32 %v416, 0.00028619796
  %v418 = vmul.f32 %v415, %v417
  %v419 = vadd.f32 %v418, 0.0036580483
  %v420 = vmul.f32 %v415, %v419
  %v421 = vadd.f32 %v420, 0.05243302
  %v422 = vmul.f32 %v415, %v421
  %v423 = vadd.f32 %v422, 0.18741608
  %v424 = vmul.f32 %v415, %v423
  %v425 = vadd.f32 %v424, 1.1283791
  %v426 = vmul.f32 %v171, %v425
  %v427 = vmul.f32 %v415, 3.8918573e-05
  %v428 = vadd.f32 %v427, 0.001143296
  %v429 = vmul.f32 %v415, %v428
  %v430 = vadd.f32 %v429, 0.014752088
  %v431 = vmul.f32 %v415, %v430
  %v432 = vadd.f32 %v431, 0.112945676
  %v433 = vmul.f32 %v415, %v432
  %v434 = vadd.f32 %v433, 0.4994258
  %v435 = vmul.f32 %v415, %v434
  %v436 = vadd.f32 %v435, 1.0
  %v437 = vrcp.pop %v436
  %v438 = vmul.f32 %v436, %v437
  %v439 = vsub.f32 1.0, %v438
  %v440 = vmul.f32 %v437, %v439
  %v441 = vadd.f32 %v437, %v440
  %vm442 = vweird.f32 %v436
  %vm443 = vweird.f32 %v437
  %vm444 = vmor %vm442, %vm443
  %v445 = vsel %vm444, %v437, %v441
  %v446 = vand.u32 2147483647, %v436
  %vm447 = vcmp.eq.f32.partialorder %v446, 8.507059e+37
  %v448 = vand.u32 %v436, 2147483648
  %v449 = vor.u32 1.1754944e-38, %v448
  %v450 = vsel %vm447, %v449, %v445
  %v451 = vmul.f32 %v426, %v450
  %v452 = vmin.f32 %v451, 1.0
  %v453 = vmax.f32 %v452, -1.0
  %v454 = vmul.f32 %v172, %v172
  %v455 = vmin.f32 16.0, %v454
  %v456 = vmul.f32 %v455, 2.1237322e-06
  %v457 = vadd.f32 %v456, 0.00028619796
  %v458 = vmul.f32 %v455, %v457
  %v459 = vadd.f32 %v458, 0.0036580483
  %v460 = vmul.f32 %v455, %v459
  %v461 = vadd.f32 %v460, 0.05243302
  %v462 = vmul.f32 %v455, %v461
  %v463 = vadd.f32 %v462, 0.18741608
  %v464 = vmul.f32 %v455, %v463
  %v465 = vadd.f32 %v464, 1.1283791
  %v466 = vmul.f32 %v172, %v465
  %v467 = vmul.f32 %v455, 3.8918573e-05
  %v468 = vadd.f32 %v467, 0.001143296
  %v469 = vmul.f32 %v455, %v468
  %v470 = vadd.f32 %v469, 0.014752088
  %v471 = vmul.f32 %v455, %v470
  %v472 = vadd.f32 %v471, 0.112945676
  %v473 = vmul.f32 %v455, %v472
  %v474 = vadd.f32 %v473, 0.4994258
  %v475 = vmul.f32 %v455, %v474
  %v476 = vadd.f32 %v475, 1.0
  %v477 = vrcp.pop %v476
  %v478 = vmul.f32 %v476, %v477
  %v479 = vsub.f32 1.0, %v478
  %v480 = vmul.f32 %v477, %v479
  %v481 = vadd.f32 %v477, %v480
  %vm482 = vweird.f32 %v476
  %vm483 = vweird.f32 %v477
  %vm484 = vmor %vm482, %vm483
  %v485 = vsel %vm484, %v477, %v481
  %v486 = vand.u32 2147483647, %v476
  %vm487 = vcmp.eq.f32.partialorder %v486, 8.507059e+37
  %v488 = vand.u32 %v476, 2147483648
  %v489 = vor.u32 1.1754944e-38, %v488
  %v490 = vsel %vm487, %v489, %v485
  %v491 = vmul.f32 %v466, %v490
  %v492 = vmin.f32 %v491, 1.0
  %v493 = vmax.f32 %v492, -1.0
  %v494 = vmul.f32 %v173, %v173
  %v495 = vmin.f32 16.0, %v494
  %v496 = vmul.f32 %v495, 2.1237322e-06
  %v497 = vadd.f32 %v496, 0.00028619796
  %v498 = vmul.f32 %v495, %v497
  %v499 = vadd.f32 %v498, 0.0036580483
  %v500 = vmul.f32 %v495, %v499
  %v501 = vadd.f32 %v500, 0.05243302
  %v502 = vmul.f32 %v495, %v501
  %v503 = vadd.f32 %v502, 0.18741608
  %v504 = vmul.f32 %v495, %v503
  %v505 = vadd.f32 %v504, 1.1283791
  %v506 = vmul.f32 %v173, %v505
  %v507 = vmul.f32 %v495, 3.8918573e-05
  %v508 = vadd.f32 %v507, 0.001143296
  %v509 = vmul.f32 %v495, %v508
  %v510 = vadd.f32 %v509, 0.014752088
  %v511 = vmul.f32 %v495, %v510
  %v512 = vadd.f32 %v511, 0.112945676
  %v513 = vmul.f32 %v495, %v512
  %v514 = vadd.f32 %v513, 0.4994258
  %v515 = vmul.f32 %v495, %v514
  %v516 = vadd.f32 %v515, 1.0
  %v517 = vrcp.pop %v516
  %v518 = vmul.f32 %v516, %v517
  %v519 = vsub.f32 1.0, %v518
  %v520 = vmul.f32 %v517, %v519
  %v521 = vadd.f32 %v517, %v520
  %vm522 = vweird.f32 %v516
  %vm523 = vweird.f32 %v517
  %vm524 = vmor %vm522, %vm523
  %v525 = vsel %vm524, %v517, %v521
  %v526 = vand.u32 2147483647, %v516
  %vm527 = vcmp.eq.f32.partialorder %v526, 8.507059e+37
  %v528 = vand.u32 %v516, 2147483648
  %v529 = vor.u32 1.1754944e-38, %v528
  %v530 = vsel %vm527, %v529, %v525
  %v531 = vmul.f32 %v506, %v530
  %v532 = vmin.f32 %v531, 1.0
  %v533 = vmax.f32 %v532, -1.0
  %v534 = vadd.f32 %v213, 1.0
  %v535 = vadd.f32 %v253, 1.0
  %v536 = vadd.f32 %v293, 1.0
  %v537 = vadd.f32 %v333, 1.0
  %v538 = vadd.f32 %v373, 1.0
  %v539 = vadd.f32 %v413, 1.0
  %v540 = vadd.f32 %v453, 1.0
  %v541 = vadd.f32 %v493, 1.0
  %v542 = vadd.f32 %v533, 1.0
  %v543 = vmul.f32 %v156, %v534
  %v544 = vmul.f32 %v157, %v535
  %v545 = vmul.f32 %v158, %v536
  %v546 = vmul.f32 %v159, %v537
  %v547 = vmul.f32 %v160, %v538
  %v548 = vmul.f32 %v161, %v539
  %v549 = vmul.f32 %v162, %v540
  %v550 = vmul.f32 %v163, %v541
  %v551 = vmul.f32 %v164, %v542
  %s552 = smul.u32 0, 128
  %v553 = vlaneseq
  %v554 = vand.u32 %v553, 127
  %v555 = vstv %s552
  %v556 = vadd.s32 %v555, %v554
  %vm557 = vcmp.lt.s32.totalorder %v556, 8
  %v558 = vsel %vm557, %v543, 0.0
  %v559 = vsel %vm557, %v544, 0.0
  %v560 = vsel %vm557, %v545, 0.0
  %v561 = vsel %vm557, %v546, 0.0
  %v562 = vsel %vm557, %v547, 0.0
  %v563 = vsel %vm557, %v548, 0.0
  %v564 = vsel %vm557, %v549, 0.0
  %v565 = vsel %vm557, %v550, 0.0
  %v566 = vsel %vm557, %v551, 0.0
  %v567 = vld [vmem:[%s3] sm:$0xff]
  %v568 = vld [vmem:[%s3 + $0x8] sm:$0xff]
  %v569 = vpack.c.bf16 %v568, %v567
  %v570 = vpack.c.bf16 %v559, %v558
  %v571 = vpack.c.bf16 %v561, %v560
  %v572 = vpack.c.bf16 %v563, %v562
  %v573 = vpack.c.bf16 %v565, %v564
  %v574 = vpack.c.bf16 %v566, %v566
  %vm575 = vcmask 588800
  %v577 = vsel %vm575, %v569, 0
  %vm579 = vcmask 1043456
  %v581 = vsel %vm579, %v574, 0
  %583 = vmatpush.bf16.msra.mxu0 0
  %584 = vmatpush.bf16.msra.mxu0 0
  %585 = vmatpush.bf16.msra.mxu0 0
  %586 = vmatpush.bf16.msra.mxu0 %v581
  %587 = vmatpush.bf16.msra.mxu0 %v573
  %588 = vmatpush.bf16.msra.mxu0 %v572
  %589 = vmatpush.bf16.msra.mxu0 %v571
  %590 = vmatpush.bf16.msra.mxu0 %v570
  %591 = vmatmul.bf16.gmra.mxu0 %v577
  %v592 = vpop.f32.mrf.mxu0
  %v593 = vadd.f32 0.0, %v592
  %v594 = vpop.f32.mrf.mxu0
  %v595 = vadd.f32 0.0, %v594
  %596 = vdwg.mxu0
  %597 = vst [vmem:[%s4] sm:$0xff] %v593
  %598 = vst [vmem:[%s4 + $0x8] sm:$0xff] %v595
  %599 = vadd.xlane.f32.xlu0 %v593
  %v600 = vpop.xlane.xlu0 %599
  %601 = vadd.xlane.f32.xlu0 %v595
  %v602 = vpop.xlane.xlu0 %601
  %v603 = vmul.f32 %v593, %v593
  %v604 = vmul.f32 %v595, %v595
  %605 = vadd.xlane.f32.xlu0 %v603
  %v606 = vpop.xlane.xlu0 %605
  %607 = vadd.xlane.f32.xlu0 %v604
  %v608 = vpop.xlane.xlu0 %607
  %p609 = scmp.eq.s32.totalorder 0, 0
  // Predicated region
  $region18: #{_lambda_.7} parent=0 // pred_check
    %p610 = pneg %p609
  $region19: #{_lambda_.7} parent=0 // pred_check_branch
    %612 = sbr.rel (%p610) target = $region21
  $region20: #{_lambda_.7} parent=0 // pred_region
    %vm613 = vcmask 7168
    %614 = vst.msk [vmem:[%s5] sm:$0xff] %vm613, %v600
    %615 = vst.msk [vmem:[%s5 + $0x8] sm:$0xff] %vm613, %v602
    %616 = vst.msk [vmem:[%s6] sm:$0xff] %vm613, %v606
    %617 = vst.msk [vmem:[%s6 + $0x8] sm:$0xff] %vm613, %v608
  $region21: #{_lambda_.7} parent=0 // pred_fallthru
    _
  %p618 = scmp.ne.s32.totalorder 0, 0
  // Predicated region
  $region22: #{_lambda_.7} parent=0 // pred_check
    %p619 = pneg %p618
  $region23: #{_lambda_.7} parent=0 // pred_check_branch
    %621 = sbr.rel (%p619) target = $region25
  $region24: #{_lambda_.7} parent=0 // pred_region
    %v622 = vld [vmem:[%s5] sm:$0xff]
    %v623 = vld [vmem:[%s5 + $0x8] sm:$0xff]
    %v624 = vadd.f32 %v622, %v600
    %v625 = vadd.f32 %v623, %v602
    %vm626 = vcmask 7168
    %627 = vst.msk [vmem:[%s5] sm:$0xff] %vm626, %v624
    %628 = vst.msk [vmem:[%s5 + $0x8] sm:$0xff] %vm626, %v625
    %v629 = vld [vmem:[%s6] sm:$0xff]
    %v630 = vld [vmem:[%s6 + $0x8] sm:$0xff]
    %v631 = vadd.f32 %v629, %v606
    %v632 = vadd.f32 %v630, %v608
    %633 = vst.msk [vmem:[%s6] sm:$0xff] %vm626, %v631
    %634 = vst.msk [vmem:[%s6 + $0x8] sm:$0xff] %vm626, %v632
  $region25: #{_lambda_.7} parent=0 // pred_fallthru
    _
  // Predicated region
  $region26: #{_lambda_.7} parent=0 // pred_check
    _
  $region27: #{_lambda_.7} parent=0 // pred_check_branch
    %636 = sbr.rel (0) target = $region29
  $region28: #{_lambda_.7} parent=0 // pred_region
    _
  $region29: #{_lambda_.7} parent=0 // pred_fallthru
    _
  // Predicated region
  $region30: #{_lambda_.7} parent=0 // pred_check
    _
  $region31: #{_lambda_.7} parent=0 // pred_check_branch
    %638 = sbr.rel (0) target = $region33
  $region32: #{_lambda_.7} parent=0 // pred_region
    _
  $region33: #{_lambda_.7} parent=0 // pred_fallthru
    _
  // Predicated region
  $region34: #{_lambda_.7} parent=0 // pred_check
    _
  $region35: #{_lambda_.7} parent=0 // pred_check_branch
    %640 = sbr.rel (0) target = $region37
  $region36: #{_lambda_.7} parent=0 // pred_region
    _
  $region37: #{_lambda_.7} parent=0 // pred_fallthru
    _
  // Predicated region
  $region38: #{_lambda_.7} parent=0 // pred_check
    _
  $region39: #{_lambda_.7} parent=0 // pred_check_branch
    %642 = sbr.rel (0) target = $region41
  $region40: #{_lambda_.7} parent=0 // pred_region
    _
  $region41: #{_lambda_.7} parent=0 // pred_fallthru
    _
  // Predicated region
  $region42: #{_lambda_.7} parent=0 // pred_check
    _
  $region43: #{_lambda_.7} parent=0 // pred_check_branch
    %644 = sbr.rel (0) target = $region45
  $region44: #{_lambda_.7} parent=0 // pred_region
    _
  $region45: #{_lambda_.7} parent=0 // pred_fallthru
    _
  // Predicated region
  $region46: #{_lambda_.7} parent=0 // pred_check
    _
  $region47: #{_lambda_.7} parent=0 // pred_check_branch
    %646 = sbr.rel (0) target = $region49
  $region48: #{_lambda_.7} parent=0 // pred_region
    _
  $region49: #{_lambda_.7} parent=0 // pred_fallthru
    _

// kernel: _lambda_.8
$region0: #{_lambda_.8}
  #allocation0 [shape = 'u32[]', space=smem, size = 0x4, offset = 0x4, fixed_abs, tag = 'smem constant byte address 0x4 - core index']
  #allocation1 [shape = 'u32[72,128]{1,0:T(1,128)}', space=vmem, size = 0x9000, scoped, tag = 'internal scratch']
  %s0 = inlined_call_operand.vmem [shape: f32[16,128], index: 0, kind: input, shape index: {}]
  %s1 = inlined_call_operand.vmem [shape: f32[16,1], index: 1, kind: input, shape index: {}]
  %s2 = inlined_call_operand.vmem [shape: f32[16,1], index: 2, kind: input, shape index: {}]
  %s3 = inlined_call_operand.vmem [shape: f32[32,16], index: 3, kind: input, shape index: {}]
  %s4 = inlined_call_operand.vmem [shape: f32[32,128], index: 4, kind: output, shape index: {0}]
  %s5 = inlined_call_operand.vmem [shape: f32[32,1], index: 5, kind: output, shape index: {1}]
  %s6 = inlined_call_operand.vmem [shape: f32[32,1], index: 6, kind: output, shape index: {2}]
  %7 = xla_tuple %s4, %s5, %s6
  %s8 = sld [smem:[#allocation0]]
  $region50: #{_lambda_.8} parent=0
    _
  %s10 = ssub.s32 1, %s8
  %s11 = scalar_select 0, %s10, %s8
  // Predicated region
  $region2: #{_lambda_.8} parent=0 // pred_check
    _
  $region3: #{_lambda_.8} parent=0 // pred_check_branch
    %13 = sbr.rel (0) target = $region5
  $region4: #{_lambda_.8} parent=0 // pred_region
    _
  $region5: #{_lambda_.8} parent=0 // pred_fallthru
    _
  // Predicated region
  $region6: #{_lambda_.8} parent=0 // pred_check
    _
  $region7: #{_lambda_.8} parent=0 // pred_check_branch
    %15 = sbr.rel (0) target = $region9
  $region8: #{_lambda_.8} parent=0 // pred_region
    _
  $region9: #{_lambda_.8} parent=0 // pred_fallthru
    _
  // Predicated region
  $region10: #{_lambda_.8} parent=0 // pred_check
    _
  $region11: #{_lambda_.8} parent=0 // pred_check_branch
    %17 = sbr.rel (0) target = $region13
  $region12: #{_lambda_.8} parent=0 // pred_region
    _
  $region13: #{_lambda_.8} parent=0 // pred_fallthru
    _
  // Predicated region
  $region14: #{_lambda_.8} parent=0 // pred_check
    _
  $region15: #{_lambda_.8} parent=0 // pred_check_branch
    %19 = sbr.rel (0) target = $region17
  $region16: #{_lambda_.8} parent=0 // pred_region
    _
  $region17: #{_lambda_.8} parent=0 // pred_fallthru
    _
  %v21 = vld [vmem:[%s0] sm:$0xff]
  %v22 = vld [vmem:[%s0 + $0x8] sm:$0xff]
  %v23 = vld [vmem:[%s1] sm:$0xff]
  %v24 = vld [vmem:[%s1 + $0x8] sm:$0xff]
  %26 = vset.pattern.permute.xlu0 0
  %27 = vperm.xlu0 %26, %v23
  %v28 = vpop.permute.xlu0 %27
  %31 = vset.pattern.permute.xlu0 0
  %32 = vperm.xlu0 %31, %v24
  %v33 = vpop.permute.xlu0 %32
  %v35 = vmul.f32 %v21, %v28
  %v36 = vmul.f32 %v22, %v33
  %v37 = vld [vmem:[%s2] sm:$0xff]
  %v38 = vld [vmem:[%s2 + $0x8] sm:$0xff]
  %40 = vset.pattern.permute.xlu0 0
  %41 = vperm.xlu0 %40, %v37
  %v42 = vpop.permute.xlu0 %41
  %45 = vset.pattern.permute.xlu0 0
  %46 = vperm.xlu0 %45, %v38
  %v47 = vpop.permute.xlu0 %46
  %v49 = vadd.f32 %v35, %v42
  %v50 = vadd.f32 %v36, %v47
  %v51 = vmul.f32 %v49, 0.5
  %v52 = vmul.f32 %v50, 0.5
  %v53 = vmul.f32 %v49, 0.70710677
  %v54 = vmul.f32 %v50, 0.70710677
  %v55 = vmul.f32 %v53, %v53
  %v56 = vmin.f32 16.0, %v55
  %v57 = vmul.f32 %v56, 2.1237322e-06
  %v58 = vadd.f32 %v57, 0.00028619796
  %v59 = vmul.f32 %v56, %v58
  %v60 = vadd.f32 %v59, 0.0036580483
  %v61 = vmul.f32 %v56, %v60
  %v62 = vadd.f32 %v61, 0.05243302
  %v63 = vmul.f32 %v56, %v62
  %v64 = vadd.f32 %v63, 0.18741608
  %v65 = vmul.f32 %v56, %v64
  %v66 = vadd.f32 %v65, 1.1283791
  %v67 = vmul.f32 %v53, %v66
  %v68 = vmul.f32 %v56, 3.8918573e-05
  %v69 = vadd.f32 %v68, 0.001143296
  %v70 = vmul.f32 %v56, %v69
  %v71 = vadd.f32 %v70, 0.014752088
  %v72 = vmul.f32 %v56, %v71
  %v73 = vadd.f32 %v72, 0.112945676
  %v74 = vmul.f32 %v56, %v73
  %v75 = vadd.f32 %v74, 0.4994258
  %v76 = vmul.f32 %v56, %v75
  %v77 = vadd.f32 %v76, 1.0
  %v78 = vrcp.pop %v77
  %v79 = vmul.f32 %v77, %v78
  %v80 = vsub.f32 1.0, %v79
  %v81 = vmul.f32 %v78, %v80
  %v82 = vadd.f32 %v78, %v81
  %vm83 = vweird.f32 %v77
  %vm84 = vweird.f32 %v78
  %vm85 = vmor %vm83, %vm84
  %v86 = vsel %vm85, %v78, %v82
  %v87 = vand.u32 2147483647, %v77
  %vm88 = vcmp.eq.f32.partialorder %v87, 8.507059e+37
  %v89 = vand.u32 %v77, 2147483648
  %v90 = vor.u32 1.1754944e-38, %v89
  %v91 = vsel %vm88, %v90, %v86
  %v92 = vmul.f32 %v67, %v91
  %v93 = vmin.f32 %v92, 1.0
  %v94 = vmax.f32 %v93, -1.0
  %v95 = vmul.f32 %v54, %v54
  %v96 = vmin.f32 16.0, %v95
  %v97 = vmul.f32 %v96, 2.1237322e-06
  %v98 = vadd.f32 %v97, 0.00028619796
  %v99 = vmul.f32 %v96, %v98
  %v100 = vadd.f32 %v99, 0.0036580483
  %v101 = vmul.f32 %v96, %v100
  %v102 = vadd.f32 %v101, 0.05243302
  %v103 = vmul.f32 %v96, %v102
  %v104 = vadd.f32 %v103, 0.18741608
  %v105 = vmul.f32 %v96, %v104
  %v106 = vadd.f32 %v105, 1.1283791
  %v107 = vmul.f32 %v54, %v106
  %v108 = vmul.f32 %v96, 3.8918573e-05
  %v109 = vadd.f32 %v108, 0.001143296
  %v110 = vmul.f32 %v96, %v109
  %v111 = vadd.f32 %v110, 0.014752088
  %v112 = vmul.f32 %v96, %v111
  %v113 = vadd.f32 %v112, 0.112945676
  %v114 = vmul.f32 %v96, %v113
  %v115 = vadd.f32 %v114, 0.4994258
  %v116 = vmul.f32 %v96, %v115
  %v117 = vadd.f32 %v116, 1.0
  %v118 = vrcp.pop %v117
  %v119 = vmul.f32 %v117, %v118
  %v120 = vsub.f32 1.0, %v119
  %v121 = vmul.f32 %v118, %v120
  %v122 = vadd.f32 %v118, %v121
  %vm123 = vweird.f32 %v117
  %vm124 = vweird.f32 %v118
  %vm125 = vmor %vm123, %vm124
  %v126 = vsel %vm125, %v118, %v122
  %v127 = vand.u32 2147483647, %v117
  %vm128 = vcmp.eq.f32.partialorder %v127, 8.507059e+37
  %v129 = vand.u32 %v117, 2147483648
  %v130 = vor.u32 1.1754944e-38, %v129
  %v131 = vsel %vm128, %v130, %v126
  %v132 = vmul.f32 %v107, %v131
  %v133 = vmin.f32 %v132, 1.0
  %v134 = vmax.f32 %v133, -1.0
  %v135 = vadd.f32 %v94, 1.0
  %v136 = vadd.f32 %v134, 1.0
  %v137 = vmul.f32 %v51, %v135
  %v138 = vmul.f32 %v52, %v136
  %s139 = smul.u32 0, 128
  %v140 = vlaneseq
  %v141 = vand.u32 %v140, 127
  %v142 = vstv %s139
  %v143 = vadd.s32 %v142, %v141
  %vm144 = vcmp.lt.s32.totalorder %v143, 8
  %v145 = vsel %vm144, %v137, 0.0
  %v146 = vsel %vm144, %v138, 0.0
  %v147 = vld [vmem:[%s3] sm:$0xff]
  %v148 = vld [vmem:[%s3 + $0x8] sm:$0xff]
  %v149 = vld [vmem:[%s3 + $0x10] sm:$0xff]
  %v150 = vld [vmem:[%s3 + $0x18] sm:$0xff]
  %v151 = vpack.c.bf16 %v148, %v147
  %v152 = vpack.c.bf16 %v150, %v149
  %v153 = vpack.c.bf16 %v146, %v145
  %vm154 = vcmask 130048
  %v156 = vsel %vm154, %v151, 0
  %v159 = vsel %vm154, %v152, 0
  %161 = vmatpush.bf16.msra.mxu0 0
  %162 = vmatpush.bf16.msra.mxu0 0
  %163 = vmatpush.bf16.msra.mxu0 0
  %164 = vmatpush.bf16.msra.mxu0 0
  %165 = vmatpush.bf16.msra.mxu0 0
  %166 = vmatpush.bf16.msra.mxu0 0
  %167 = vmatpush.bf16.msra.mxu0 0
  %168 = vmatpush.bf16.msra.mxu0 %v153
  %169 = vmatmul.bf16.gmra.mxu0 %v156
  %v170 = vpop.f32.mrf.mxu0
  %v171 = vadd.f32 0.0, %v170
  %v172 = vpop.f32.mrf.mxu0
  %v173 = vadd.f32 0.0, %v172
  %174 = vmatmul.bf16.gmra.mxu0 %v159
  %v175 = vpop.f32.mrf.mxu0
  %v176 = vadd.f32 0.0, %v175
  %v177 = vpop.f32.mrf.mxu0
  %v178 = vadd.f32 0.0, %v177
  %179 = vdwg.mxu0
  %180 = vst [vmem:[%s4] sm:$0xff] %v171
  %181 = vst [vmem:[%s4 + $0x8] sm:$0xff] %v173
  %182 = vst [vmem:[%s4 + $0x10] sm:$0xff] %v176
  %183 = vst [vmem:[%s4 + $0x18] sm:$0xff] %v178
  %184 = vadd.xlane.f32.xlu0 %v171
  %v185 = vpop.xlane.xlu0 %184
  %186 = vadd.xlane.f32.xlu0 %v173
  %v187 = vpop.xlane.xlu0 %186
  %188 = vadd.xlane.f32.xlu0 %v176
  %v189 = vpop.xlane.xlu0 %188
  %190 = vadd.xlane.f32.xlu0 %v178
  %v191 = vpop.xlane.xlu0 %190
  %v192 = vmul.f32 %v171, %v171
  %v193 = vmul.f32 %v173, %v173
  %v194 = vmul.f32 %v176, %v176
  %v195 = vmul.f32 %v178, %v178
  %196 = vadd.xlane.f32.xlu0 %v192
  %v197 = vpop.xlane.xlu0 %196
  %198 = vadd.xlane.f32.xlu0 %v193
  %v199 = vpop.xlane.xlu0 %198
  %200 = vadd.xlane.f32.xlu0 %v194
  %v201 = vpop.xlane.xlu0 %200
  %202 = vadd.xlane.f32.xlu0 %v195
  %v203 = vpop.xlane.xlu0 %202
  %p204 = scmp.eq.s32.totalorder 0, 0
  // Predicated region
  $region18: #{_lambda_.8} parent=0 // pred_check
    %p205 = pneg %p204
  $region19: #{_lambda_.8} parent=0 // pred_check_branch
    %207 = sbr.rel (%p205) target = $region21
  $region20: #{_lambda_.8} parent=0 // pred_region
    %vm208 = vcmask 7168
    %209 = vst.msk [vmem:[%s5] sm:$0xff] %vm208, %v185
    %210 = vst.msk [vmem:[%s5 + $0x8] sm:$0xff] %vm208, %v187
    %211 = vst.msk [vmem:[%s5 + $0x10] sm:$0xff] %vm208, %v189
    %212 = vst.msk [vmem:[%s5 + $0x18] sm:$0xff] %vm208, %v191
    %213 = vst.msk [vmem:[%s6] sm:$0xff] %vm208, %v197
    %214 = vst.msk [vmem:[%s6 + $0x8] sm:$0xff] %vm208, %v199
    %215 = vst.msk [vmem:[%s6 + $0x10] sm:$0xff] %vm208, %v201
    %216 = vst.msk [vmem:[%s6 + $0x18] sm:$0xff] %vm208, %v203
  $region21: #{_lambda_.8} parent=0 // pred_fallthru
    _
  %p217 = scmp.ne.s32.totalorder 0, 0
  // Predicated region
  $region22: #{_lambda_.8} parent=0 // pred_check
    %p218 = pneg %p217
  $region23: #{_lambda_.8} parent=0 // pred_check_branch
    %220 = sbr.rel (%p218) target = $region25
  $region24: #{_lambda_.8} parent=0 // pred_region
    %v221 = vld [vmem:[%s5] sm:$0xff]
    %v222 = vld [vmem:[%s5 + $0x8] sm:$0xff]
    %v223 = vld [vmem:[%s5 + $0x10] sm:$0xff]
    %v224 = vld [vmem:[%s5 + $0x18] sm:$0xff]
    %v225 = vadd.f32 %v221, %v185
    %v226 = vadd.f32 %v222, %v187
    %v227 = vadd.f32 %v223, %v189
    %v228 = vadd.f32 %v224, %v191
    %vm229 = vcmask 7168
    %230 = vst.msk [vmem:[%s5] sm:$0xff] %vm229, %v225
    %231 = vst.msk [vmem:[%s5 + $0x8] sm:$0xff] %vm229, %v226
    %232 = vst.msk [vmem:[%s5 + $0x10] sm:$0xff] %vm229, %v227
    %233 = vst.msk [vmem:[%s5 + $0x18] sm:$0xff] %vm229, %v228
    %v234 = vld [vmem:[%s6] sm:$0xff]
    %v235 = vld [vmem:[%s6 + $0x8] sm:$0xff]
    %v236 = vld [vmem:[%s6 + $0x10] sm:$0xff]
    %v237 = vld [vmem:[%s6 + $0x18] sm:$0xff]
    %v238 = vadd.f32 %v234, %v197
    %v239 = vadd.f32 %v235, %v199
    %v240 = vadd.f32 %v236, %v201
    %v241 = vadd.f32 %v237, %v203
    %242 = vst.msk [vmem:[%s6] sm:$0xff] %vm229, %v238
    %243 = vst.msk [vmem:[%s6 + $0x8] sm:$0xff] %vm229, %v239
    %244 = vst.msk [vmem:[%s6 + $0x10] sm:$0xff] %vm229, %v240
    %245 = vst.msk [vmem:[%s6 + $0x18] sm:$0xff] %vm229, %v241
  $region25: #{_lambda_.8} parent=0 // pred_fallthru
    _
  // Predicated region
  $region26: #{_lambda_.8} parent=0 // pred_check
    _
  $region27: #{_lambda_.8} parent=0 // pred_check_branch
    %247 = sbr.rel (0) target = $region29
  $region28: #{_lambda_.8} parent=0 // pred_region
    _
  $region29: #{_lambda_.8} parent=0 // pred_fallthru
    _
  // Predicated region
  $region30: #{_lambda_.8} parent=0 // pred_check
    _
  $region31: #{_lambda_.8} parent=0 // pred_check_branch
    %249 = sbr.rel (0) target = $region33
  $region32: #{_lambda_.8} parent=0 // pred_region
    _
  $region33: #{_lambda_.8} parent=0 // pred_fallthru
    _
  // Predicated region
  $region34: #{_lambda_.8} parent=0 // pred_check
    _
  $region35: #{_lambda_.8} parent=0 // pred_check_branch
    %251 = sbr.rel (0) target = $region37
  $region36: #{_lambda_.8} parent=0 // pred_region
    _
  $region37: #{_lambda_.8} parent=0 // pred_fallthru
    _
  // Predicated region
  $region38: #{_lambda_.8} parent=0 // pred_check
    _
  $region39: #{_lambda_.8} parent=0 // pred_check_branch
    %253 = sbr.rel (0) target = $region41
  $region40: #{_lambda_.8} parent=0 // pred_region
    _
  $region41: #{_lambda_.8} parent=0 // pred_fallthru
    _
  // Predicated region
  $region42: #{_lambda_.8} parent=0 // pred_check
    _
  $region43: #{_lambda_.8} parent=0 // pred_check_branch
    %255 = sbr.rel (0) target = $region45
  $region44: #{_lambda_.8} parent=0 // pred_region
    _
  $region45: #{_lambda_.8} parent=0 // pred_fallthru
    _
  // Predicated region
  $region46: #{_lambda_.8} parent=0 // pred_check
    _
  $region47: #{_lambda_.8} parent=0 // pred_check_branch
    %257 = sbr.rel (0) target = $region49
  $region48: #{_lambda_.8} parent=0 // pred_region
    _
  $region49: #{_lambda_.8} parent=0 // pred_fallthru
    _

</llo_original>
